<compile_context>
chip_gen: v7x
topology: tpu7x:2x2x1
jax: 0.10.0
libtpu: 0.0.40
codegen_flags: <defaults>
</compile_context>

<pallas_src>
import functools

import jax
import jax.numpy as jnp
from jax.experimental import pallas as pl
from jax.experimental.pallas import tpu as pltpu

Z_DIM = 64
H1 = 512
H2 = 256
IMG_DIM = 256    # small synthetic image dim (e.g. 16x16 flattened)
LEAKY_SLOPE = 0.1


def _leaky_relu(x, slope=LEAKY_SLOPE):
    return jnp.where(x > 0, x, slope * x)


def _round_up(n, m):
    return ((n + m - 1) // m) * m


def _device_kind():
    try:
        return jax.devices()[0].device_kind.lower()
    except Exception:
        return ""


def generator_kernel(x_ref, w1_ref, b1_ref, w2_ref, b2_ref, w3_ref, b3_ref,
                     o_ref, *, ew_dtype):
    # Cast the f32 x tile to the MXU input dtype (bf16) in-kernel: free on VPU
    # slack instead of an un-hidden XLA pass over x in HBM.
    x = x_ref[...].astype(w1_ref.dtype)

    # Layer 1: Linear (bf16 MXU inputs, f32 accumulate) -> bias + LeakyReLU(0.1).
    h = jnp.dot(x, w1_ref[...], preferred_element_type=jnp.float32)
    h = _leaky_relu(h.astype(ew_dtype) + b1_ref[...].astype(ew_dtype))

    # Layer 2: Linear -> bias + LeakyReLU(0.1).
    h = jnp.dot(h.astype(w2_ref.dtype), w2_ref[...],
                preferred_element_type=jnp.float32)
    h = _leaky_relu(h.astype(ew_dtype) + b2_ref[...].astype(ew_dtype))

    # Layer 3: Linear -> bias + Tanh (EUP).
    h = jnp.dot(h.astype(w3_ref.dtype), w3_ref[...],
                preferred_element_type=jnp.float32)
    h = jnp.tanh(h.astype(ew_dtype) + b3_ref[...].astype(ew_dtype))
    o_ref[...] = h.astype(o_ref.dtype)


def _pick_tile(B, tb, kind):
    if tb is None:
        # v6e/v7x: ~0.35us per-step overhead dominates a 256-row tile of MXU
        # work, so go big. v5e / older / unknown: MXU M is already full at 128.
        tb = 512 if ("v6" in kind or "v7" in kind) else 128
    # Don't over-tile tiny batches (the boundary block is clipped anyway).
    tb = max(8, min(tb, _round_up(B, 128)))
    # Guarantee >= 2 grid steps when there's enough work so both v7x
    # TensorCores get a batch tile; harmless elsewhere.
    while B > 128 and tb > 128 and pl.cdiv(B, tb) < 2:
        tb = _round_up(tb // 2, 128)
    return tb


def generator_forward(x, params, *, tb=None, ew_dtype=None, out_dtype=jnp.bfloat16):
    """x: [B, Z_DIM] float32 -> [B, IMG_DIM] in `out_dtype` (default bf16)."""
    w1, b1, w2, b2, w3, b3 = params
    B, Z = x.shape
    assert Z == Z_DIM

    kind = _device_kind()
    if ew_dtype is None:
        # bf16 elementwise/tanh only where the VPU/EUP are bf16-native.
        ew_dtype = jnp.bfloat16 if ("v6" in kind or "v7" in kind) else jnp.float32
    tb = _pick_tile(B, tb, kind)
    grid = (pl.cdiv(B, tb),)

    resident = lambda i: (0, 0)  # weights/biases: same VMEM block every grid step

    flops = 2 * B * (Z_DIM * H1 + H1 * H2 + H2 * IMG_DIM)
    bytes_accessed = (
        x.size * x.dtype.itemsize
        + sum(a.size * a.dtype.itemsize for a in (w1, b1, w2, b2, w3, b3))
        + B * IMG_DIM * jnp.dtype(out_dtype).itemsize
    )

    return pl.pallas_call(
        functools.partial(generator_kernel, ew_dtype=ew_dtype),
        out_shape=jax.ShapeDtypeStruct((B, IMG_DIM), out_dtype),
        grid_spec=pltpu.PrefetchScalarGridSpec(
            num_scalar_prefetch=0,
            grid=grid,
            in_specs=[
                pl.BlockSpec((tb, Z_DIM), lambda i: (i, 0)),   # x tile (streams)
                pl.BlockSpec((Z_DIM, H1), resident),           # W1 (resident)
                pl.BlockSpec((1, H1), resident),               # b1
                pl.BlockSpec((H1, H2), resident),              # W2
                pl.BlockSpec((1, H2), resident),               # b2
                pl.BlockSpec((H2, IMG_DIM), resident),         # W3
                pl.BlockSpec((1, IMG_DIM), resident),          # b3
            ],
            out_specs=pl.BlockSpec((tb, IMG_DIM), lambda i: (i, 0)),
        ),
        compiler_params=pltpu.CompilerParams(
            dimension_semantics=("parallel",),
        ),
        cost_estimate=pl.CostEstimate(
            flops=flops,
            transcendentals=B * IMG_DIM,      # tanh
            bytes_accessed=bytes_accessed,
        ),
    )(x, w1, b1, w2, b2, w3, b3)


def init_params(key, *, matmul_dtype=jnp.bfloat16):
    """PyTorch nn.Linear default init: U(-1/sqrt(fan_in), 1/sqrt(fan_in)).
    Weights stored [in, out] (transposed from torch) in the MXU dtype (bf16);
    biases stay fp32."""
    def linear(key, fan_in, fan_out):
        kw, kb = jax.random.split(key)
        bound = 1.0 / jnp.sqrt(fan_in)
        w = jax.random.uniform(kw, (fan_in, fan_out), jnp.float32, -bound, bound)
        b = jax.random.uniform(kb, (1, fan_out), jnp.float32, -bound, bound)
        return w.astype(matmul_dtype), b

    k1, k2, k3 = jax.random.split(key, 3)
    w1, b1 = linear(k1, Z_DIM, H1)
    w2, b2 = linear(k2, H1, H2)
    w3, b3 = linear(k3, H2, IMG_DIM)
    return (w1, b1, w2, b2, w3, b3)


def reference_forward(x, params, *, ew_dtype=jnp.float32, out_dtype=jnp.float32):
    """Pure-JAX reference with kernel-matched numerics: bf16 MXU inputs, f32
    accumulate, `ew_dtype` elementwise/tanh."""
    w1, b1, w2, b2, w3, b3 = params

    def dot(a, w):
        return jnp.dot(a.astype(w.dtype), w, preferred_element_type=jnp.float32)

    h = _leaky_relu(dot(x, w1).astype(ew_dtype) + b1.astype(ew_dtype))
    h = _leaky_relu(dot(h, w2).astype(ew_dtype) + b2.astype(ew_dtype))
    h = jnp.tanh(dot(h, w3).astype(ew_dtype) + b3.astype(ew_dtype))
    return h.astype(out_dtype)


if __name__ == "__main__":
    key = jax.random.PRNGKey(0)
    kp, kx = jax.random.split(key)
    params = init_params(kp)

    # Deliberately not a multiple of the batch tile: exercises the clipped
    # boundary block and gives >= 2 grid steps on every generation.
    B = 300
    x = jax.random.normal(kx, (B, Z_DIM), jnp.float32)

    out = jax.block_until_ready(generator_forward(x, params))

    kind = _device_kind()
    ew = jnp.bfloat16 if ("v6" in kind or "v7" in kind) else jnp.float32
    ref = reference_forward(x, params, ew_dtype=ew, out_dtype=jnp.float32)

    assert out.shape == (B, IMG_DIM)
    assert out.dtype == jnp.bfloat16
    # bf16 MXU inputs / bf16 output -> compare at bf16-appropriate tolerance.
    assert jnp.allclose(out.astype(jnp.float32), ref, atol=3e-2, rtol=3e-2), (
        "mismatch vs JAX reference, max abs err "
        f"{jnp.max(jnp.abs(out.astype(jnp.float32) - ref))}")

    print("KERNEL_OK")
</pallas_src>

<mosaic_0001>
module attributes {stable_mosaic.version = 11 : i64} {
  func.func @generator_kernel(%arg0: i32, %arg1: memref<128x64xf32, #tpu.memory_space<vmem>>, %arg2: memref<64x512xbf16, #tpu.memory_space<vmem>>, %arg3: memref<1x512xf32, #tpu.memory_space<vmem>>, %arg4: memref<512x256xbf16, #tpu.memory_space<vmem>>, %arg5: memref<1x256xf32, #tpu.memory_space<vmem>>, %arg6: memref<256x256xbf16, #tpu.memory_space<vmem>>, %arg7: memref<1x256xf32, #tpu.memory_space<vmem>>, %arg8: memref<128x256xbf16, #tpu.memory_space<vmem>>) attributes {dimension_semantics = [#tpu.dimension_semantics<parallel>], iteration_bounds = array<i64: 3>, scalar_prefetch = 0 : i64, scratch_operands = 0 : i64, tpu.core_type = #tpu.core_type<tc>, window_params = [{transform_indices = @transform_0, window_bounds = array<i64: 128, 64>}, {pipeline_mode = #tpu.pipeline_mode<synchronous>, transform_indices = @transform_1, window_bounds = array<i64: 64, 512>}, {pipeline_mode = #tpu.pipeline_mode<synchronous>, transform_indices = @transform_2, window_bounds = array<i64: 1, 512>}, {pipeline_mode = #tpu.pipeline_mode<synchronous>, transform_indices = @transform_3, window_bounds = array<i64: 512, 256>}, {pipeline_mode = #tpu.pipeline_mode<synchronous>, transform_indices = @transform_4, window_bounds = array<i64: 1, 256>}, {pipeline_mode = #tpu.pipeline_mode<synchronous>, transform_indices = @transform_5, window_bounds = array<i64: 256, 256>}, {pipeline_mode = #tpu.pipeline_mode<synchronous>, transform_indices = @transform_6, window_bounds = array<i64: 1, 256>}, {transform_indices = @transform_7, window_bounds = array<i64: 128, 256>}]} {
    %c0 = arith.constant 0 : index
    %c0_0 = arith.constant 0 : index
    %0 = vector.load %arg1[%c0, %c0_0] : memref<128x64xf32, #tpu.memory_space<vmem>>, vector<128x64xf32>
    %1 = arith.truncf %0 : vector<128x64xf32> to vector<128x64xbf16>
    %c0_1 = arith.constant 0 : index
    %c0_2 = arith.constant 0 : index
    %2 = vector.load %arg2[%c0_1, %c0_2] : memref<64x512xbf16, #tpu.memory_space<vmem>>, vector<64x512xbf16>
    %cst = arith.constant dense<0.000000e+00> : vector<128x512xf32>
    %3 = tpu.matmul %1, %2, %cst {dimension_numbers = #tpu.dot_dimension_numbers<[1], [0], [0], [1], [0, 0, 1, 1], [], []>} : vector<128x64xbf16>, vector<64x512xbf16>, vector<128x512xf32> -> vector<128x512xf32>
    %c0_3 = arith.constant 0 : index
    %c0_4 = arith.constant 0 : index
    %4 = vector.load %arg3[%c0_3, %c0_4] : memref<1x512xf32, #tpu.memory_space<vmem>>, vector<1x512xf32>
    %5 = vector.broadcast %4 : vector<1x512xf32> to vector<128x512xf32>
    %6 = arith.addf %3, %5 : vector<128x512xf32>
    %cst_5 = arith.constant 0.000000e+00 : f32
    %7 = vector.broadcast %cst_5 : f32 to vector<128x512xf32>
    %8 = arith.cmpf ogt, %6, %7 : vector<128x512xf32>
    %cst_6 = arith.constant 1.000000e-01 : f32
    %9 = vector.broadcast %cst_6 : f32 to vector<128x512xf32>
    %10 = arith.mulf %9, %6 : vector<128x512xf32>
    %11 = arith.select %8, %6, %10 : vector<128x512xi1>, vector<128x512xf32>
    %12 = arith.truncf %11 : vector<128x512xf32> to vector<128x512xbf16>
    %c0_7 = arith.constant 0 : index
    %c0_8 = arith.constant 0 : index
    %13 = vector.load %arg4[%c0_7, %c0_8] : memref<512x256xbf16, #tpu.memory_space<vmem>>, vector<512x256xbf16>
    %cst_9 = arith.constant dense<0.000000e+00> : vector<128x256xf32>
    %14 = tpu.matmul %12, %13, %cst_9 {dimension_numbers = #tpu.dot_dimension_numbers<[1], [0], [0], [1], [0, 0, 1, 1], [], []>} : vector<128x512xbf16>, vector<512x256xbf16>, vector<128x256xf32> -> vector<128x256xf32>
    %c0_10 = arith.constant 0 : index
    %c0_11 = arith.constant 0 : index
    %15 = vector.load %arg5[%c0_10, %c0_11] : memref<1x256xf32, #tpu.memory_space<vmem>>, vector<1x256xf32>
    %16 = vector.broadcast %15 : vector<1x256xf32> to vector<128x256xf32>
    %17 = arith.addf %14, %16 : vector<128x256xf32>
    %cst_12 = arith.constant 0.000000e+00 : f32
    %18 = vector.broadcast %cst_12 : f32 to vector<128x256xf32>
    %19 = arith.cmpf ogt, %17, %18 : vector<128x256xf32>
    %cst_13 = arith.constant 1.000000e-01 : f32
    %20 = vector.broadcast %cst_13 : f32 to vector<128x256xf32>
    %21 = arith.mulf %20, %17 : vector<128x256xf32>
    %22 = arith.select %19, %17, %21 : vector<128x256xi1>, vector<128x256xf32>
    %23 = arith.truncf %22 : vector<128x256xf32> to vector<128x256xbf16>
    %c0_14 = arith.constant 0 : index
    %c0_15 = arith.constant 0 : index
    %24 = vector.load %arg6[%c0_14, %c0_15] : memref<256x256xbf16, #tpu.memory_space<vmem>>, vector<256x256xbf16>
    %cst_16 = arith.constant dense<0.000000e+00> : vector<128x256xf32>
    %25 = tpu.matmul %23, %24, %cst_16 {dimension_numbers = #tpu.dot_dimension_numbers<[1], [0], [0], [1], [0, 0, 1, 1], [], []>} : vector<128x256xbf16>, vector<256x256xbf16>, vector<128x256xf32> -> vector<128x256xf32>
    %c0_17 = arith.constant 0 : index
    %c0_18 = arith.constant 0 : index
    %26 = vector.load %arg7[%c0_17, %c0_18] : memref<1x256xf32, #tpu.memory_space<vmem>>, vector<1x256xf32>
    %27 = vector.broadcast %26 : vector<1x256xf32> to vector<128x256xf32>
    %28 = arith.addf %25, %27 : vector<128x256xf32>
    %29 = math.tanh %28 : vector<128x256xf32>
    %30 = arith.truncf %29 : vector<128x256xf32> to vector<128x256xbf16>
    %c0_19 = arith.constant 0 : index
    %c0_20 = arith.constant 0 : index
    %31 = vector.load %arg8[%c0_19, %c0_20] : memref<128x256xbf16, #tpu.memory_space<vmem>>, vector<128x256xbf16>
    tpu.vector_store %arg8[%c0_19, %c0_20], %30 {strides = array<i32>} : memref<128x256xbf16, #tpu.memory_space<vmem>>, vector<128x256xbf16>,
    return
  }
  func.func @transform_0(%arg0: i32) -> (i32, i32) {
    %c0_i32 = arith.constant 0 : i32
    %c0_i32_0 = arith.constant 0 : i32
    return %arg0, %c0_i32 : i32, i32
  }
  func.func @transform_1(%arg0: i32) -> (i32, i32) {
    %c0_i32 = arith.constant 0 : i32
    %c0_i32_0 = arith.constant 0 : i32
    %c0_i32_1 = arith.constant 0 : i32
    return %c0_i32, %c0_i32_0 : i32, i32
  }
  func.func @transform_2(%arg0: i32) -> (i32, i32) {
    %c0_i32 = arith.constant 0 : i32
    %c0_i32_0 = arith.constant 0 : i32
    %c0_i32_1 = arith.constant 0 : i32
    return %c0_i32, %c0_i32_0 : i32, i32
  }
  func.func @transform_3(%arg0: i32) -> (i32, i32) {
    %c0_i32 = arith.constant 0 : i32
    %c0_i32_0 = arith.constant 0 : i32
    %c0_i32_1 = arith.constant 0 : i32
    return %c0_i32, %c0_i32_0 : i32, i32
  }
  func.func @transform_4(%arg0: i32) -> (i32, i32) {
    %c0_i32 = arith.constant 0 : i32
    %c0_i32_0 = arith.constant 0 : i32
    %c0_i32_1 = arith.constant 0 : i32
    return %c0_i32, %c0_i32_0 : i32, i32
  }
  func.func @transform_5(%arg0: i32) -> (i32, i32) {
    %c0_i32 = arith.constant 0 : i32
    %c0_i32_0 = arith.constant 0 : i32
    %c0_i32_1 = arith.constant 0 : i32
    return %c0_i32, %c0_i32_0 : i32, i32
  }
  func.func @transform_6(%arg0: i32) -> (i32, i32) {
    %c0_i32 = arith.constant 0 : i32
    %c0_i32_0 = arith.constant 0 : i32
    %c0_i32_1 = arith.constant 0 : i32
    return %c0_i32, %c0_i32_0 : i32, i32
  }
  func.func @transform_7(%arg0: i32) -> (i32, i32) {
    %c0_i32 = arith.constant 0 : i32
    %c0_i32_0 = arith.constant 0 : i32
    return %arg0, %c0_i32 : i32, i32
  }
}

</mosaic_0001>

<llo_original>
// kernel: tpu_custom_call.1
$region0: #{tpu_custom_call.1}
  #allocation0 [shape = 'u32[]', space=smem, size = 0x4, offset = 0x4, fixed_abs, tag = 'smem constant byte address 0x4 - core index']
  #allocation1 [shape = 'u32[144,128]{1,0:T(1,128)}', space=vmem, size = 0x12000, scoped, tag = 'internal scratch']
  %s0 = inlined_call_operand.vmem [shape: f32[300,64], index: 0, kind: input, shape index: {}]
  %s1 = inlined_call_operand.vmem [shape: bf16[64,512], index: 1, kind: input, shape index: {}]
  %s2 = inlined_call_operand.vmem [shape: f32[1,512], index: 2, kind: input, shape index: {}]
  %s3 = inlined_call_operand.hbm [shape: bf16[512,256], index: 3, kind: input, shape index: {}]
  %s4 = inlined_call_operand.vmem [shape: f32[1,256], index: 4, kind: input, shape index: {}]
  %s5 = inlined_call_operand.vmem [shape: bf16[256,256], index: 5, kind: input, shape index: {}]
  %s6 = inlined_call_operand.vmem [shape: f32[1,256], index: 6, kind: input, shape index: {}]
  %s7 = inlined_call_operand.hbm [shape: bf16[300,256], index: 7, kind: output, shape index: {}]
  %s8 = sld [smem:[#allocation0]]
  $region65: #{tpu_custom_call.1} parent=0
    _
  %s10 = ssub.s32 1, %s8
  %s11 = scalar_select 0, %s10, %s8
  $region1: #{tpu_custom_call.1} parent=0
    #allocation2 [shape = 'u8[262144]{0}', space=vmem, size = 0x40000, scoped, tag = 'input window, operand 3, single buffered']
    #allocation3 [shape = 's32[2]{0}', space=sflag, size = 0x8, scoped, tag = 'scoped memory for tpu_custom_call.1']
    #allocation4 [shape = 's32[2]{0}', space=sflag, size = 0x8, scoped, tag = 'scoped memory for tpu_custom_call.1']
    #allocation5 [shape = 'u8[131072]{0}', space=vmem, size = 0x20000, scoped, tag = 'output window, operand 0']
    %12 = vsyncpa [#allocation3], 0
    %13 = vsyncpa [#allocation4], 0
    %s14 = scalar_lea.sflag [#allocation4], 1
    %15 = vsyncpa %s14, 0
    loop: start=0, step=1, limit=5
    $region2: #{tpu_custom_call.1} parent=1 // loop_pre_header
      _
    $region3: #{tpu_custom_call.1} parent=1 // loop_header
      %s17 = sphi 0, %s21
      %p18 = scmp.ge.s32.totalorder %s17, 5
      %s27 = sphi 0, %s29
      %s30 = sphi 0, %s27
      %s31 = sphi 0, %s30
      %s47 = sphi 0, %s31
      %s51 = sphi 0, %s51
      %s53 = sphi 0, %s51
      %s54 = sphi 0, %s53
      %s68 = sphi 0, %s54
      %s72 = sphi 0, %s72
      %s74 = sphi 0, %s72
      %s75 = sphi 0, %s74
      %s89 = sphi 0, %s75
      %s93 = sphi 0, %s93
      %s95 = sphi 0, %s93
      %s96 = sphi 0, %s95
      %s110 = sphi 0, %s96
      %s114 = sphi 0, %s114
      %s116 = sphi 0, %s114
      %s117 = sphi 0, %s116
      %s131 = sphi 0, %s117
      %s135 = sphi 0, %s135
      %s137 = sphi 0, %s135
      %s138 = sphi 0, %s137
      %s152 = sphi 0, %s138
      %s156 = sphi 0, %s156
      %s158 = sphi 0, %s156
      %s159 = sphi 0, %s158
      %s173 = sphi 0, %s159
      %s179 = sphi 0, %s181
      %s182 = sphi 0, %s179
      %s183 = sphi 0, %s182
      %s199 = sphi 0, %s183
    $region4: #{tpu_custom_call.1} parent=1 // loop_header_branch
      %20 = sbr.rel (%p18) target = $region8
    $region5: #{tpu_custom_call.1} parent=1 // loop_body
      %s22 = ssub.s32 %s17, 1
      %s23 = ssub.s32 %s17, 2
      %s24 = sadd.s32 %s17, 1
      %s25 = ssub.s32 %s17, %s24
      %p26 = scmp.eq.s32.totalorder %s25, 0
      %s28 = sadd.s32 %s27, 1
      %s29 = scalar_select %p26, %s27, %s28
      %p32 = pneg %p26
      %p33 = scmp.eq.s32.totalorder %s17, 2
      %p34 = por %p32, %p33
      %p35 = scmp.ne.s32.totalorder %s27, %s30
      %p36 = scmp.eq.s32.totalorder %s17, 0
      %p37 = por %p35, %p36
      %p38 = scmp.ne.s32.totalorder %s27, %s30
      %p39 = scmp.eq.s32.totalorder %s22, 2
      %p40 = por %p38, %p39
      %p41 = scmp.ne.s32.totalorder %s30, %s31
      %p42 = scmp.eq.s32.totalorder %s22, 0
      %p43 = por %p41, %p42
      %p44 = scmp.ne.s32.totalorder %s30, %s31
      %p45 = scmp.eq.s32.totalorder %s23, 2
      %p46 = por %p44, %p45
      %p48 = scmp.ne.s32.totalorder %s31, %s47
      %p49 = scmp.eq.s32.totalorder %s23, 0
      %p50 = por %p48, %p49
      %s52 = sadd.s32 %s51, 1
      %p55 = scmp.eq.s32.totalorder %s17, 2
      %p56 = scmp.ne.s32.totalorder %s51, %s53
      %p57 = scmp.eq.s32.totalorder %s17, 0
      %p58 = por %p56, %p57
      %p59 = scmp.ne.s32.totalorder %s51, %s53
      %p60 = scmp.eq.s32.totalorder %s22, 2
      %p61 = por %p59, %p60
      %p62 = scmp.ne.s32.totalorder %s53, %s54
      %p63 = scmp.eq.s32.totalorder %s22, 0
      %p64 = por %p62, %p63
      %p65 = scmp.ne.s32.totalorder %s53, %s54
      %p66 = scmp.eq.s32.totalorder %s23, 2
      %p67 = por %p65, %p66
      %p69 = scmp.ne.s32.totalorder %s54, %s68
      %p70 = scmp.eq.s32.totalorder %s23, 0
      %p71 = por %p69, %p70
      %s73 = sadd.s32 %s72, 1
      %p76 = scmp.eq.s32.totalorder %s17, 2
      %p77 = scmp.ne.s32.totalorder %s72, %s74
      %p78 = scmp.eq.s32.totalorder %s17, 0
      %p79 = por %p77, %p78
      %p80 = scmp.ne.s32.totalorder %s72, %s74
      %p81 = scmp.eq.s32.totalorder %s22, 2
      %p82 = por %p80, %p81
      %p83 = scmp.ne.s32.totalorder %s74, %s75
      %p84 = scmp.eq.s32.totalorder %s22, 0
      %p85 = por %p83, %p84
      %p86 = scmp.ne.s32.totalorder %s74, %s75
      %p87 = scmp.eq.s32.totalorder %s23, 2
      %p88 = por %p86, %p87
      %p90 = scmp.ne.s32.totalorder %s75, %s89
      %p91 = scmp.eq.s32.totalorder %s23, 0
      %p92 = por %p90, %p91
      %s94 = sadd.s32 %s93, 1
      %p97 = scmp.eq.s32.totalorder %s17, 2
      %p98 = scmp.ne.s32.totalorder %s93, %s95
      %p99 = scmp.eq.s32.totalorder %s17, 0
      %p100 = por %p98, %p99
      %p101 = scmp.ne.s32.totalorder %s93, %s95
      %p102 = scmp.eq.s32.totalorder %s22, 2
      %p103 = por %p101, %p102
      %p104 = scmp.ne.s32.totalorder %s95, %s96
      %p105 = scmp.eq.s32.totalorder %s22, 0
      %p106 = por %p104, %p105
      %p107 = scmp.ne.s32.totalorder %s95, %s96
      %p108 = scmp.eq.s32.totalorder %s23, 2
      %p109 = por %p107, %p108
      %p111 = scmp.ne.s32.totalorder %s96, %s110
      %p112 = scmp.eq.s32.totalorder %s23, 0
      %p113 = por %p111, %p112
      %s115 = sadd.s32 %s114, 1
      %p118 = scmp.eq.s32.totalorder %s17, 2
      %p119 = scmp.ne.s32.totalorder %s114, %s116
      %p120 = scmp.eq.s32.totalorder %s17, 0
      %p121 = por %p119, %p120
      %p122 = scmp.ne.s32.totalorder %s114, %s116
      %p123 = scmp.eq.s32.totalorder %s22, 2
      %p124 = por %p122, %p123
      %p125 = scmp.ne.s32.totalorder %s116, %s117
      %p126 = scmp.eq.s32.totalorder %s22, 0
      %p127 = por %p125, %p126
      %p128 = scmp.ne.s32.totalorder %s116, %s117
      %p129 = scmp.eq.s32.totalorder %s23, 2
      %p130 = por %p128, %p129
      %p132 = scmp.ne.s32.totalorder %s117, %s131
      %p133 = scmp.eq.s32.totalorder %s23, 0
      %p134 = por %p132, %p133
      %s136 = sadd.s32 %s135, 1
      %p139 = scmp.eq.s32.totalorder %s17, 2
      %p140 = scmp.ne.s32.totalorder %s135, %s137
      %p141 = scmp.eq.s32.totalorder %s17, 0
      %p142 = por %p140, %p141
      %p143 = scmp.ne.s32.totalorder %s135, %s137
      %p144 = scmp.eq.s32.totalorder %s22, 2
      %p145 = por %p143, %p144
      %p146 = scmp.ne.s32.totalorder %s137, %s138
      %p147 = scmp.eq.s32.totalorder %s22, 0
      %p148 = por %p146, %p147
      %p149 = scmp.ne.s32.totalorder %s137, %s138
      %p150 = scmp.eq.s32.totalorder %s23, 2
      %p151 = por %p149, %p150
      %p153 = scmp.ne.s32.totalorder %s138, %s152
      %p154 = scmp.eq.s32.totalorder %s23, 0
      %p155 = por %p153, %p154
      %s157 = sadd.s32 %s156, 1
      %p160 = scmp.eq.s32.totalorder %s17, 2
      %p161 = scmp.ne.s32.totalorder %s156, %s158
      %p162 = scmp.eq.s32.totalorder %s17, 0
      %p163 = por %p161, %p162
      %p164 = scmp.ne.s32.totalorder %s156, %s158
      %p165 = scmp.eq.s32.totalorder %s22, 2
      %p166 = por %p164, %p165
      %p167 = scmp.ne.s32.totalorder %s158, %s159
      %p168 = scmp.eq.s32.totalorder %s22, 0
      %p169 = por %p167, %p168
      %p170 = scmp.ne.s32.totalorder %s158, %s159
      %p171 = scmp.eq.s32.totalorder %s23, 2
      %p172 = por %p170, %p171
      %p174 = scmp.ne.s32.totalorder %s159, %s173
      %p175 = scmp.eq.s32.totalorder %s23, 0
      %p176 = por %p174, %p175
      %s177 = ssub.s32 %s17, %s24
      %p178 = scmp.eq.s32.totalorder %s177, 0
      %s180 = sadd.s32 %s179, 1
      %s181 = scalar_select %p178, %s179, %s180
      %p184 = pneg %p178
      %p185 = scmp.eq.s32.totalorder %s17, 2
      %p186 = por %p184, %p185
      %p187 = scmp.ne.s32.totalorder %s179, %s182
      %p188 = scmp.eq.s32.totalorder %s17, 0
      %p189 = por %p187, %p188
      %p190 = scmp.ne.s32.totalorder %s179, %s182
      %p191 = scmp.eq.s32.totalorder %s22, 2
      %p192 = por %p190, %p191
      %p193 = scmp.ne.s32.totalorder %s182, %s183
      %p194 = scmp.eq.s32.totalorder %s22, 0
      %p195 = por %p193, %p194
      %p196 = scmp.ne.s32.totalorder %s182, %s183
      %p197 = scmp.eq.s32.totalorder %s23, 2
      %p198 = por %p196, %p197
      %p200 = scmp.ne.s32.totalorder %s183, %s199
      %p201 = scmp.eq.s32.totalorder %s23, 0
      %p202 = por %p200, %p201
      %p203 = scmp.le.s32.totalorder 1, %s17
      %p204 = scmp.lt.s32.totalorder %s17, 4
      %p205 = pnand %p203, %p204
      %p206 = pneg %p205
      // Predicated region
      $region9: #{tpu_custom_call.1} parent=5 // pred_check
        _
      $region10: #{tpu_custom_call.1} parent=5 // pred_check_branch
        %208 = sbr.rel (%p205) target = $region12
      $region11: #{tpu_custom_call.1} parent=5 // pred_region
        %s209 = ssub.s32 %s17, 1
        // Predicated region
        $region13: #{tpu_custom_call.1} parent=11 // pred_check
          %p210 = pneg %p64
        $region14: #{tpu_custom_call.1} parent=11 // pred_check_branch
          %212 = sbr.rel (%p210) target = $region16
        $region15: #{tpu_custom_call.1} parent=11 // pred_region
          _
        $region16: #{tpu_custom_call.1} parent=11 // pred_fallthru
          _
        // Predicated region
        $region17: #{tpu_custom_call.1} parent=11 // pred_check
          %p213 = pneg %p85
        $region18: #{tpu_custom_call.1} parent=11 // pred_check_branch
          %215 = sbr.rel (%p213) target = $region20
        $region19: #{tpu_custom_call.1} parent=11 // pred_region
          _
        $region20: #{tpu_custom_call.1} parent=11 // pred_fallthru
          _
        // Predicated region
        $region21: #{tpu_custom_call.1} parent=11 // pred_check
          %p216 = pneg %p106
        $region22: #{tpu_custom_call.1} parent=11 // pred_check_branch
          %218 = sbr.rel (%p216) target = $region24
        $region23: #{tpu_custom_call.1} parent=11 // pred_region
          %s220 = ssub.s32 8192, 8192
          %221 = vsyncadd [#allocation3], %s220
          %s222 = sshll.u32 [#allocation2], 4
          %s223 = int_to_ptr.vmem [resolvable:$true] %s222
          %228 = dma.hbm_to_vmem [thread:$0]  %s3, 8192, %s223, [#allocation3], 128, 128, 8
        $region24: #{tpu_custom_call.1} parent=11 // pred_fallthru
          _
        // Predicated region
        $region25: #{tpu_custom_call.1} parent=11 // pred_check
          %p229 = pneg %p127
        $region26: #{tpu_custom_call.1} parent=11 // pred_check_branch
          %231 = sbr.rel (%p229) target = $region28
        $region27: #{tpu_custom_call.1} parent=11 // pred_region
          _
        $region28: #{tpu_custom_call.1} parent=11 // pred_fallthru
          _
        // Predicated region
        $region29: #{tpu_custom_call.1} parent=11 // pred_check
          %p232 = pneg %p148
        $region30: #{tpu_custom_call.1} parent=11 // pred_check_branch
          %234 = sbr.rel (%p232) target = $region32
        $region31: #{tpu_custom_call.1} parent=11 // pred_region
          _
        $region32: #{tpu_custom_call.1} parent=11 // pred_fallthru
          _
        // Predicated region
        $region33: #{tpu_custom_call.1} parent=11 // pred_check
          %p235 = pneg %p169
        $region34: #{tpu_custom_call.1} parent=11 // pred_check_branch
          %237 = sbr.rel (%p235) target = $region36
        $region35: #{tpu_custom_call.1} parent=11 // pred_region
          _
        $region36: #{tpu_custom_call.1} parent=11 // pred_fallthru
          _
      $region12: #{tpu_custom_call.1} parent=5 // pred_fallthru
        _
      %p238 = scmp.lt.s32.totalorder %s17, 3
      // Predicated region
      $region37: #{tpu_custom_call.1} parent=5 // pred_check
        %p239 = pneg %p238
      $region38: #{tpu_custom_call.1} parent=5 // pred_check_branch
        %241 = sbr.rel (%p239) target = $region40
      $region39: #{tpu_custom_call.1} parent=5 // pred_region
        // Predicated region
        $region41: #{tpu_custom_call.1} parent=39 // pred_check
          %p242 = pneg %p37
        $region42: #{tpu_custom_call.1} parent=39 // pred_check_branch
          %244 = sbr.rel (%p242) target = $region44
        $region43: #{tpu_custom_call.1} parent=39 // pred_region
          %s245 = smul.u32 16, %s17
          %s246 = ssub.s32 38, %s245
          %p247 = scmp.lt.s32.totalorder %s246, 16
          %s248 = scalar_select %p247, %s246, 16
          %s249 = smul.u32 128, %s248
          %p250 = scmp.lt.s32.totalorder %s245, 37
          %s251 = scalar_select %p250, %s245, 37
          %s252 = smul.addr %s251, 8
          %s253 = scalar_lea.vmem %s0, %s252
          %s254 = smul.u32 16, %s17
          %s255 = ssub.s32 38, %s254
          %p256 = scmp.lt.s32.totalorder %s255, 16
          %s257 = scalar_select %p256, %s255, 16
          %s258 = smul.u32 128, %s257
        $region44: #{tpu_custom_call.1} parent=39 // pred_fallthru
          _
      $region40: #{tpu_custom_call.1} parent=5 // pred_fallthru
        _
      %p259 = scmp.le.s32.totalorder 1, %s17
      %p260 = scmp.lt.s32.totalorder %s17, 4
      %p261 = pnand %p259, %p260
      %p262 = pneg %p261
      // Predicated region
      $region45: #{tpu_custom_call.1} parent=5 // pred_check
        _
      $region46: #{tpu_custom_call.1} parent=5 // pred_check_branch
        %264 = sbr.rel (%p261) target = $region48
      $region47: #{tpu_custom_call.1} parent=5 // pred_region
        %s265 = ssub.s32 %s17, 1
        // Predicated region
        $region49: #{tpu_custom_call.1} parent=47 // pred_check
          %p266 = pneg %p106
        $region50: #{tpu_custom_call.1} parent=47 // pred_check_branch
          %268 = sbr.rel (%p266) target = $region52
        $region51: #{tpu_custom_call.1} parent=47 // pred_region
          %269 = dma.done [#allocation3], 8192
        $region52: #{tpu_custom_call.1} parent=47 // pred_fallthru
          _
        %s270 = smul.u32 16, %s22
        %s271 = ssub.s32 38, %s270
        %p272 = scmp.lt.s32.totalorder %s271, 16
        %s273 = scalar_select %p272, %s271, 16
        %s274 = smul.u32 128, %s273
        %p275 = scmp.lt.s32.totalorder %s270, 37
        %s276 = scalar_select %p275, %s270, 37
        %s277 = smul.addr %s276, 8
        %s278 = scalar_lea.vmem %s0, %s277
        %p279 = pneg %p43
        %p280 = pneg %p40
        %p281 = pneg %p64
        %p282 = pneg %p61
        %p283 = pneg %p85
        %p284 = pneg %p82
        %p285 = pneg %p106
        %p286 = pneg %p103
        %p287 = pneg %p127
        %p288 = pneg %p124
        %p289 = pneg %p148
        %p290 = pneg %p145
        %p291 = pneg %p169
        %p292 = pneg %p166
        %p293 = pneg %p195
        %p294 = pneg %p192
        %s295 = sand.u32 %s182, 1
        %s296 = scalar_lea.sflag [#allocation4], %s295
        %s297 = sand.u32 %s182, 1
        %s298 = smul.addr %s297, 128
        %s299 = scalar_lea.vmem [#allocation5], %s298
        %s300 = smul.u32 16, %s22
        %s301 = ssub.s32 38, %s300
        %p302 = scmp.lt.s32.totalorder %s301, 16
        %s303 = scalar_select %p302, %s301, 16
        %s304 = smul.u32 128, %s303
        %p305 = scmp.lt.s32.totalorder %s300, 37
        %s306 = scalar_select %p305, %s300, 37
        %s307 = smul.addr %s306, 8
        %s308 = scalar_lea.vmem %s0, %s307
        %s309 = smul.u32 16, %s22
        %s310 = ssub.s32 38, %s309
        %p311 = scmp.lt.s32.totalorder %s310, 16
        %s312 = scalar_select %p311, %s310, 16
        %s313 = smul.u32 128, %s312
        %s314 = smul.u32 16, %s22
        %s315 = ssub.s32 38, %s314
        %p316 = scmp.lt.s32.totalorder %s315, 16
        %s317 = scalar_select %p316, %s315, 16
        %s318 = smul.u32 64, %s317
        %s319 = smul.u32 %s318, 2
        %v321 = vld [vmem:[%s308] sm:$0xff]
        %v322 = vld [vmem:[%s308 + $0x8] sm:$0xff]
        %v323 = vld [vmem:[%s308 + $0x10] sm:$0xff]
        %v324 = vld [vmem:[%s308 + $0x18] sm:$0xff]
        %v325 = vld [vmem:[%s308 + $0x20] sm:$0xff]
        %v326 = vld [vmem:[%s308 + $0x28] sm:$0xff]
        %v327 = vld [vmem:[%s308 + $0x30] sm:$0xff]
        %v328 = vld [vmem:[%s308 + $0x38] sm:$0xff]
        %v329 = vld [vmem:[%s308 + $0x40] sm:$0xff]
        %v330 = vld [vmem:[%s308 + $0x48] sm:$0xff]
        %v331 = vld [vmem:[%s308 + $0x50] sm:$0xff]
        %v332 = vld [vmem:[%s308 + $0x58] sm:$0xff]
        %v333 = vld [vmem:[%s308 + $0x60] sm:$0xff]
        %v334 = vld [vmem:[%s308 + $0x68] sm:$0xff]
        %v335 = vld [vmem:[%s308 + $0x70] sm:$0xff]
        %v336 = vld [vmem:[%s308 + $0x78] sm:$0xff]
        %v337 = vpack.c.bf16 %v322, %v321
        %v338 = vpack.c.bf16 %v324, %v323
        %v339 = vpack.c.bf16 %v326, %v325
        %v340 = vpack.c.bf16 %v328, %v327
        %v341 = vpack.c.bf16 %v330, %v329
        %v342 = vpack.c.bf16 %v332, %v331
        %v343 = vpack.c.bf16 %v334, %v333
        %v344 = vpack.c.bf16 %v336, %v335
        %v345 = vld [vmem:[%s1] sm:$0xff]
        %v346 = vld [vmem:[%s1 + $0x8] sm:$0xff]
        %v347 = vld [vmem:[%s1 + $0x10] sm:$0xff]
        %v348 = vld [vmem:[%s1 + $0x18] sm:$0xff]
        %v349 = vld [vmem:[%s1 + $0x20] sm:$0xff]
        %v350 = vld [vmem:[%s1 + $0x28] sm:$0xff]
        %v351 = vld [vmem:[%s1 + $0x30] sm:$0xff]
        %v352 = vld [vmem:[%s1 + $0x38] sm:$0xff]
        %v353 = vld [vmem:[%s1 + $0x40] sm:$0xff]
        %v354 = vld [vmem:[%s1 + $0x48] sm:$0xff]
        %v355 = vld [vmem:[%s1 + $0x50] sm:$0xff]
        %v356 = vld [vmem:[%s1 + $0x58] sm:$0xff]
        %v357 = vld [vmem:[%s1 + $0x60] sm:$0xff]
        %v358 = vld [vmem:[%s1 + $0x68] sm:$0xff]
        %v359 = vld [vmem:[%s1 + $0x70] sm:$0xff]
        %v360 = vld [vmem:[%s1 + $0x78] sm:$0xff]
        %v361 = vld [vmem:[%s2] sm:$0xf]
        %v363 = vlaneseq
        %v364 = vshrl.u32 %v363, 7
        %v365 = vsub.s32 0, %v364
        %v366 = vrot.slane %v361, %v365
        %v367 = vlaneseq
        %v368 = vshrl.u32 %v367, 7
        %v369 = vsub.s32 1, %v368
        %v370 = vrot.slane %v361, %v369
        %v371 = vlaneseq
        %v372 = vshrl.u32 %v371, 7
        %v373 = vsub.s32 2, %v372
        %v374 = vrot.slane %v361, %v373
        %v375 = vlaneseq
        %v376 = vshrl.u32 %v375, 7
        %v377 = vsub.s32 3, %v376
        %v378 = vrot.slane %v361, %v377
        %v399 = vunpack.c.l.b16 %v345
        %v400 = vunpack.c.h.b16 %v345
        %v401 = vunpack.c.l.b16 %v346
        %v402 = vunpack.c.h.b16 %v346
        %v403 = vunpack.c.l.b16 %v347
        %v404 = vunpack.c.h.b16 %v347
        %v405 = vunpack.c.l.b16 %v348
        %v406 = vunpack.c.h.b16 %v348
        %v407 = vunpack.c.l.b16 %v349
        %v408 = vunpack.c.h.b16 %v349
        %v409 = vunpack.c.l.b16 %v350
        %v410 = vunpack.c.h.b16 %v350
        %v411 = vunpack.c.l.b16 %v351
        %v412 = vunpack.c.h.b16 %v351
        %v413 = vunpack.c.l.b16 %v352
        %v414 = vunpack.c.h.b16 %v352
        %v415 = vunpack.c.l.b16 %v353
        %v416 = vunpack.c.h.b16 %v353
        %v417 = vunpack.c.l.b16 %v354
        %v418 = vunpack.c.h.b16 %v354
        %v419 = vunpack.c.l.b16 %v355
        %v420 = vunpack.c.h.b16 %v355
        %v421 = vunpack.c.l.b16 %v356
        %v422 = vunpack.c.h.b16 %v356
        %v423 = vunpack.c.l.b16 %v357
        %v424 = vunpack.c.h.b16 %v357
        %v425 = vunpack.c.l.b16 %v358
        %v426 = vunpack.c.h.b16 %v358
        %v427 = vunpack.c.l.b16 %v359
        %v428 = vunpack.c.h.b16 %v359
        %v429 = vunpack.c.l.b16 %v360
        %v430 = vunpack.c.h.b16 %v360
        %v431 = vpack.c.b16 %v403, %v399
        %v432 = vpack.c.b16 %v404, %v400
        %v433 = vpack.c.b16 %v405, %v401
        %v434 = vpack.c.b16 %v406, %v402
        %v435 = vpack.c.b16 %v411, %v407
        %v436 = vpack.c.b16 %v412, %v408
        %v437 = vpack.c.b16 %v413, %v409
        %v438 = vpack.c.b16 %v414, %v410
        %v439 = vpack.c.b16 %v419, %v415
        %v440 = vpack.c.b16 %v420, %v416
        %v441 = vpack.c.b16 %v421, %v417
        %v442 = vpack.c.b16 %v422, %v418
        %v443 = vpack.c.b16 %v427, %v423
        %v444 = vpack.c.b16 %v428, %v424
        %v445 = vpack.c.b16 %v429, %v425
        %v446 = vpack.c.b16 %v430, %v426
        %vm463 = vcmask 523264
        %v465 = vsel %vm463, %v337, 0
        %v468 = vsel %vm463, %v338, 0
        %v471 = vsel %vm463, %v339, 0
        %v474 = vsel %vm463, %v340, 0
        %v477 = vsel %vm463, %v341, 0
        %v480 = vsel %vm463, %v342, 0
        %v483 = vsel %vm463, %v343, 0
        %v486 = vsel %vm463, %v344, 0
        %488 = vmatprep.subr.bf16.mxu0 %v432
        %489 = vmatpush1.bf16.msra.mxu0 %v431
        %490 = vmatprep.subr.bf16.mxu0 %v436
        %491 = vmatpush1.bf16.msra.mxu0 %v435
        %492 = vmatprep.subr.bf16.mxu0 %v440
        %493 = vmatpush1.bf16.msra.mxu0 %v439
        %494 = vmatprep.subr.bf16.mxu0 %v444
        %495 = vmatpush1.bf16.msra.mxu0 %v443
        %496 = vmatprep.subr.bf16.mxu0 0
        %497 = vmatpush1.bf16.msra.mxu0 0
        %498 = vmatprep.subr.bf16.mxu0 0
        %499 = vmatpush1.bf16.msra.mxu0 0
        %500 = vmatprep.subr.bf16.mxu0 0
        %501 = vmatpush1.bf16.msra.mxu0 0
        %502 = vmatprep.subr.bf16.mxu0 0
        %503 = vmatpush1.bf16.msra.mxu0 0
        %504 = vmatprep.subr.bf16.mxu0 0
        %505 = vmatpush1.bf16.msra.mxu0 0
        %506 = vmatprep.subr.bf16.mxu0 0
        %507 = vmatpush1.bf16.msra.mxu0 0
        %508 = vmatprep.subr.bf16.mxu0 0
        %509 = vmatpush1.bf16.msra.mxu0 0
        %510 = vmatprep.subr.bf16.mxu0 0
        %511 = vmatpush1.bf16.msra.mxu0 0
        %512 = vmatprep.subr.bf16.mxu0 0
        %513 = vmatpush1.bf16.msra.mxu0 0
        %514 = vmatprep.subr.bf16.mxu0 0
        %515 = vmatpush1.bf16.msra.mxu0 0
        %516 = vmatprep.subr.bf16.mxu0 0
        %517 = vmatpush1.bf16.msra.mxu0 0
        %518 = vmatprep.subr.bf16.mxu0 0
        %519 = vmatpush1.bf16.msra.mxu0 0
        %520 = vmatprep.mubr.bf16.mxu0 0
        %521 = vmatmul.mubr.bf16.gmra.mrb[0].mxu0 %v465
        %v522 = vpop.f32.mrb[0].mxu0
        %v523 = vadd.f32 %v366, %v522
        %v524 = vpop.f32.mrb[0].mxu0
        %v525 = vadd.f32 %v370, %v524
        %v526 = vpop.f32.mrb[0].mxu0
        %v527 = vadd.f32 %v366, %v526
        %v528 = vpop.f32.mrb[0].mxu0
        %v529 = vadd.f32 %v370, %v528
        %530 = vmatprep.mubr.bf16.mxu0 0
        %531 = vmatmul.mubr.bf16.gmra.mrb[0].mxu0 %v468
        %v532 = vpop.f32.mrb[0].mxu0
        %v533 = vadd.f32 %v366, %v532
        %v534 = vpop.f32.mrb[0].mxu0
        %v535 = vadd.f32 %v370, %v534
        %v536 = vpop.f32.mrb[0].mxu0
        %v537 = vadd.f32 %v366, %v536
        %v538 = vpop.f32.mrb[0].mxu0
        %v539 = vadd.f32 %v370, %v538
        %540 = vmatprep.mubr.bf16.mxu0 0
        %541 = vmatmul.mubr.bf16.gmra.mrb[0].mxu0 %v471
        %v542 = vpop.f32.mrb[0].mxu0
        %v543 = vadd.f32 %v366, %v542
        %v544 = vpop.f32.mrb[0].mxu0
        %v545 = vadd.f32 %v370, %v544
        %v546 = vpop.f32.mrb[0].mxu0
        %v547 = vadd.f32 %v366, %v546
        %v548 = vpop.f32.mrb[0].mxu0
        %v549 = vadd.f32 %v370, %v548
        %550 = vmatprep.mubr.bf16.mxu0 0
        %551 = vmatmul.mubr.bf16.gmra.mrb[0].mxu0 %v474
        %v552 = vpop.f32.mrb[0].mxu0
        %v553 = vadd.f32 %v366, %v552
        %v554 = vpop.f32.mrb[0].mxu0
        %v555 = vadd.f32 %v370, %v554
        %v556 = vpop.f32.mrb[0].mxu0
        %v557 = vadd.f32 %v366, %v556
        %v558 = vpop.f32.mrb[0].mxu0
        %v559 = vadd.f32 %v370, %v558
        %560 = vmatprep.mubr.bf16.mxu0 0
        %561 = vmatmul.mubr.bf16.gmra.mrb[0].mxu0 %v477
        %v562 = vpop.f32.mrb[0].mxu0
        %v563 = vadd.f32 %v366, %v562
        %v564 = vpop.f32.mrb[0].mxu0
        %v565 = vadd.f32 %v370, %v564
        %v566 = vpop.f32.mrb[0].mxu0
        %v567 = vadd.f32 %v366, %v566
        %v568 = vpop.f32.mrb[0].mxu0
        %v569 = vadd.f32 %v370, %v568
        %570 = vmatprep.mubr.bf16.mxu0 0
        %571 = vmatmul.mubr.bf16.gmra.mrb[0].mxu0 %v480
        %v572 = vpop.f32.mrb[0].mxu0
        %v573 = vadd.f32 %v366, %v572
        %v574 = vpop.f32.mrb[0].mxu0
        %v575 = vadd.f32 %v370, %v574
        %v576 = vpop.f32.mrb[0].mxu0
        %v577 = vadd.f32 %v366, %v576
        %v578 = vpop.f32.mrb[0].mxu0
        %v579 = vadd.f32 %v370, %v578
        %580 = vmatprep.mubr.bf16.mxu0 0
        %581 = vmatmul.mubr.bf16.gmra.mrb[0].mxu0 %v483
        %v582 = vpop.f32.mrb[0].mxu0
        %v583 = vadd.f32 %v366, %v582
        %v584 = vpop.f32.mrb[0].mxu0
        %v585 = vadd.f32 %v370, %v584
        %v586 = vpop.f32.mrb[0].mxu0
        %v587 = vadd.f32 %v366, %v586
        %v588 = vpop.f32.mrb[0].mxu0
        %v589 = vadd.f32 %v370, %v588
        %590 = vmatprep.mubr.bf16.mxu0 0
        %591 = vmatmul.mubr.bf16.gmra.mrb[0].mxu0 %v486
        %v592 = vpop.f32.mrb[0].mxu0
        %v593 = vadd.f32 %v366, %v592
        %v594 = vpop.f32.mrb[0].mxu0
        %v595 = vadd.f32 %v370, %v594
        %v596 = vpop.f32.mrb[0].mxu0
        %v597 = vadd.f32 %v366, %v596
        %v598 = vpop.f32.mrb[0].mxu0
        %v599 = vadd.f32 %v370, %v598
        %600 = vdwg.mxu0
        %601 = vmatprep.subr.bf16.mxu0 %v434
        %602 = vmatpush1.bf16.msra.mxu0 %v433
        %603 = vmatprep.subr.bf16.mxu0 %v438
        %604 = vmatpush1.bf16.msra.mxu0 %v437
        %605 = vmatprep.subr.bf16.mxu0 %v442
        %606 = vmatpush1.bf16.msra.mxu0 %v441
        %607 = vmatprep.subr.bf16.mxu0 %v446
        %608 = vmatpush1.bf16.msra.mxu0 %v445
        %609 = vmatprep.subr.bf16.mxu0 0
        %610 = vmatpush1.bf16.msra.mxu0 0
        %611 = vmatprep.subr.bf16.mxu0 0
        %612 = vmatpush1.bf16.msra.mxu0 0
        %613 = vmatprep.subr.bf16.mxu0 0
        %614 = vmatpush1.bf16.msra.mxu0 0
        %615 = vmatprep.subr.bf16.mxu0 0
        %616 = vmatpush1.bf16.msra.mxu0 0
        %617 = vmatprep.subr.bf16.mxu0 0
        %618 = vmatpush1.bf16.msra.mxu0 0
        %619 = vmatprep.subr.bf16.mxu0 0
        %620 = vmatpush1.bf16.msra.mxu0 0
        %621 = vmatprep.subr.bf16.mxu0 0
        %622 = vmatpush1.bf16.msra.mxu0 0
        %623 = vmatprep.subr.bf16.mxu0 0
        %624 = vmatpush1.bf16.msra.mxu0 0
        %625 = vmatprep.subr.bf16.mxu0 0
        %626 = vmatpush1.bf16.msra.mxu0 0
        %627 = vmatprep.subr.bf16.mxu0 0
        %628 = vmatpush1.bf16.msra.mxu0 0
        %629 = vmatprep.subr.bf16.mxu0 0
        %630 = vmatpush1.bf16.msra.mxu0 0
        %631 = vmatprep.subr.bf16.mxu0 0
        %632 = vmatpush1.bf16.msra.mxu0 0
        %633 = vmatprep.mubr.bf16.mxu0 0
        %634 = vmatmul.mubr.bf16.gmra.mrb[0].mxu0 %v465
        %v635 = vpop.f32.mrb[0].mxu0
        %v636 = vadd.f32 %v374, %v635
        %v637 = vpop.f32.mrb[0].mxu0
        %v638 = vadd.f32 %v378, %v637
        %v639 = vpop.f32.mrb[0].mxu0
        %v640 = vadd.f32 %v374, %v639
        %v641 = vpop.f32.mrb[0].mxu0
        %v642 = vadd.f32 %v378, %v641
        %643 = vmatprep.mubr.bf16.mxu0 0
        %644 = vmatmul.mubr.bf16.gmra.mrb[0].mxu0 %v468
        %v645 = vpop.f32.mrb[0].mxu0
        %v646 = vadd.f32 %v374, %v645
        %v647 = vpop.f32.mrb[0].mxu0
        %v648 = vadd.f32 %v378, %v647
        %v649 = vpop.f32.mrb[0].mxu0
        %v650 = vadd.f32 %v374, %v649
        %v651 = vpop.f32.mrb[0].mxu0
        %v652 = vadd.f32 %v378, %v651
        %653 = vmatprep.mubr.bf16.mxu0 0
        %654 = vmatmul.mubr.bf16.gmra.mrb[0].mxu0 %v471
        %v655 = vpop.f32.mrb[0].mxu0
        %v656 = vadd.f32 %v374, %v655
        %v657 = vpop.f32.mrb[0].mxu0
        %v658 = vadd.f32 %v378, %v657
        %v659 = vpop.f32.mrb[0].mxu0
        %v660 = vadd.f32 %v374, %v659
        %v661 = vpop.f32.mrb[0].mxu0
        %v662 = vadd.f32 %v378, %v661
        %663 = vmatprep.mubr.bf16.mxu0 0
        %664 = vmatmul.mubr.bf16.gmra.mrb[0].mxu0 %v474
        %v665 = vpop.f32.mrb[0].mxu0
        %v666 = vadd.f32 %v374, %v665
        %v667 = vpop.f32.mrb[0].mxu0
        %v668 = vadd.f32 %v378, %v667
        %v669 = vpop.f32.mrb[0].mxu0
        %v670 = vadd.f32 %v374, %v669
        %v671 = vpop.f32.mrb[0].mxu0
        %v672 = vadd.f32 %v378, %v671
        %673 = vmatprep.mubr.bf16.mxu0 0
        %674 = vmatmul.mubr.bf16.gmra.mrb[0].mxu0 %v477
        %v675 = vpop.f32.mrb[0].mxu0
        %v676 = vadd.f32 %v374, %v675
        %v677 = vpop.f32.mrb[0].mxu0
        %v678 = vadd.f32 %v378, %v677
        %v679 = vpop.f32.mrb[0].mxu0
        %v680 = vadd.f32 %v374, %v679
        %v681 = vpop.f32.mrb[0].mxu0
        %v682 = vadd.f32 %v378, %v681
        %683 = vmatprep.mubr.bf16.mxu0 0
        %684 = vmatmul.mubr.bf16.gmra.mrb[0].mxu0 %v480
        %v685 = vpop.f32.mrb[0].mxu0
        %v686 = vadd.f32 %v374, %v685
        %v687 = vpop.f32.mrb[0].mxu0
        %v688 = vadd.f32 %v378, %v687
        %v689 = vpop.f32.mrb[0].mxu0
        %v690 = vadd.f32 %v374, %v689
        %v691 = vpop.f32.mrb[0].mxu0
        %v692 = vadd.f32 %v378, %v691
        %693 = vmatprep.mubr.bf16.mxu0 0
        %694 = vmatmul.mubr.bf16.gmra.mrb[0].mxu0 %v483
        %v695 = vpop.f32.mrb[0].mxu0
        %v696 = vadd.f32 %v374, %v695
        %v697 = vpop.f32.mrb[0].mxu0
        %v698 = vadd.f32 %v378, %v697
        %v699 = vpop.f32.mrb[0].mxu0
        %v700 = vadd.f32 %v374, %v699
        %v701 = vpop.f32.mrb[0].mxu0
        %v702 = vadd.f32 %v378, %v701
        %703 = vmatprep.mubr.bf16.mxu0 0
        %704 = vmatmul.mubr.bf16.gmra.mrb[0].mxu0 %v486
        %v705 = vpop.f32.mrb[0].mxu0
        %v706 = vadd.f32 %v374, %v705
        %v707 = vpop.f32.mrb[0].mxu0
        %v708 = vadd.f32 %v378, %v707
        %v709 = vpop.f32.mrb[0].mxu0
        %v710 = vadd.f32 %v374, %v709
        %v711 = vpop.f32.mrb[0].mxu0
        %v712 = vadd.f32 %v378, %v711
        %713 = vdwg.mxu0
        %vm714 = vcmp.gt.f32.partialorder %v523, 0.0
        %vm715 = vcmp.gt.f32.partialorder %v525, 0.0
        %vm716 = vcmp.gt.f32.partialorder %v636, 0.0
        %vm717 = vcmp.gt.f32.partialorder %v638, 0.0
        %vm718 = vcmp.gt.f32.partialorder %v527, 0.0
        %vm719 = vcmp.gt.f32.partialorder %v529, 0.0
        %vm720 = vcmp.gt.f32.partialorder %v640, 0.0
        %vm721 = vcmp.gt.f32.partialorder %v642, 0.0
        %vm722 = vcmp.gt.f32.partialorder %v533, 0.0
        %vm723 = vcmp.gt.f32.partialorder %v535, 0.0
        %vm724 = vcmp.gt.f32.partialorder %v646, 0.0
        %vm725 = vcmp.gt.f32.partialorder %v648, 0.0
        %vm726 = vcmp.gt.f32.partialorder %v537, 0.0
        %vm727 = vcmp.gt.f32.partialorder %v539, 0.0
        %vm728 = vcmp.gt.f32.partialorder %v650, 0.0
        %vm729 = vcmp.gt.f32.partialorder %v652, 0.0
        %vm730 = vcmp.gt.f32.partialorder %v543, 0.0
        %vm731 = vcmp.gt.f32.partialorder %v545, 0.0
        %vm732 = vcmp.gt.f32.partialorder %v656, 0.0
        %vm733 = vcmp.gt.f32.partialorder %v658, 0.0
        %vm734 = vcmp.gt.f32.partialorder %v547, 0.0
        %vm735 = vcmp.gt.f32.partialorder %v549, 0.0
        %vm736 = vcmp.gt.f32.partialorder %v660, 0.0
        %vm737 = vcmp.gt.f32.partialorder %v662, 0.0
        %vm738 = vcmp.gt.f32.partialorder %v553, 0.0
        %vm739 = vcmp.gt.f32.partialorder %v555, 0.0
        %vm740 = vcmp.gt.f32.partialorder %v666, 0.0
        %vm741 = vcmp.gt.f32.partialorder %v668, 0.0
        %vm742 = vcmp.gt.f32.partialorder %v557, 0.0
        %vm743 = vcmp.gt.f32.partialorder %v559, 0.0
        %vm744 = vcmp.gt.f32.partialorder %v670, 0.0
        %vm745 = vcmp.gt.f32.partialorder %v672, 0.0
        %vm746 = vcmp.gt.f32.partialorder %v563, 0.0
        %vm747 = vcmp.gt.f32.partialorder %v565, 0.0
        %vm748 = vcmp.gt.f32.partialorder %v676, 0.0
        %vm749 = vcmp.gt.f32.partialorder %v678, 0.0
        %vm750 = vcmp.gt.f32.partialorder %v567, 0.0
        %vm751 = vcmp.gt.f32.partialorder %v569, 0.0
        %vm752 = vcmp.gt.f32.partialorder %v680, 0.0
        %vm753 = vcmp.gt.f32.partialorder %v682, 0.0
        %vm754 = vcmp.gt.f32.partialorder %v573, 0.0
        %vm755 = vcmp.gt.f32.partialorder %v575, 0.0
        %vm756 = vcmp.gt.f32.partialorder %v686, 0.0
        %vm757 = vcmp.gt.f32.partialorder %v688, 0.0
        %vm758 = vcmp.gt.f32.partialorder %v577, 0.0
        %vm759 = vcmp.gt.f32.partialorder %v579, 0.0
        %vm760 = vcmp.gt.f32.partialorder %v690, 0.0
        %vm761 = vcmp.gt.f32.partialorder %v692, 0.0
        %vm762 = vcmp.gt.f32.partialorder %v583, 0.0
        %vm763 = vcmp.gt.f32.partialorder %v585, 0.0
        %vm764 = vcmp.gt.f32.partialorder %v696, 0.0
        %vm765 = vcmp.gt.f32.partialorder %v698, 0.0
        %vm766 = vcmp.gt.f32.partialorder %v587, 0.0
        %vm767 = vcmp.gt.f32.partialorder %v589, 0.0
        %vm768 = vcmp.gt.f32.partialorder %v700, 0.0
        %vm769 = vcmp.gt.f32.partialorder %v702, 0.0
        %vm770 = vcmp.gt.f32.partialorder %v593, 0.0
        %vm771 = vcmp.gt.f32.partialorder %v595, 0.0
        %vm772 = vcmp.gt.f32.partialorder %v706, 0.0
        %vm773 = vcmp.gt.f32.partialorder %v708, 0.0
        %vm774 = vcmp.gt.f32.partialorder %v597, 0.0
        %vm775 = vcmp.gt.f32.partialorder %v599, 0.0
        %vm776 = vcmp.gt.f32.partialorder %v710, 0.0
        %vm777 = vcmp.gt.f32.partialorder %v712, 0.0
        %v778 = vmul.f32 %v523, 0.1
        %v779 = vmul.f32 %v525, 0.1
        %v780 = vmul.f32 %v636, 0.1
        %v781 = vmul.f32 %v638, 0.1
        %v782 = vmul.f32 %v527, 0.1
        %v783 = vmul.f32 %v529, 0.1
        %v784 = vmul.f32 %v640, 0.1
        %v785 = vmul.f32 %v642, 0.1
        %v786 = vmul.f32 %v533, 0.1
        %v787 = vmul.f32 %v535, 0.1
        %v788 = vmul.f32 %v646, 0.1
        %v789 = vmul.f32 %v648, 0.1
        %v790 = vmul.f32 %v537, 0.1
        %v791 = vmul.f32 %v539, 0.1
        %v792 = vmul.f32 %v650, 0.1
        %v793 = vmul.f32 %v652, 0.1
        %v794 = vmul.f32 %v543, 0.1
        %v795 = vmul.f32 %v545, 0.1
        %v796 = vmul.f32 %v656, 0.1
        %v797 = vmul.f32 %v658, 0.1
        %v798 = vmul.f32 %v547, 0.1
        %v799 = vmul.f32 %v549, 0.1
        %v800 = vmul.f32 %v660, 0.1
        %v801 = vmul.f32 %v662, 0.1
        %v802 = vmul.f32 %v553, 0.1
        %v803 = vmul.f32 %v555, 0.1
        %v804 = vmul.f32 %v666, 0.1
        %v805 = vmul.f32 %v668, 0.1
        %v806 = vmul.f32 %v557, 0.1
        %v807 = vmul.f32 %v559, 0.1
        %v808 = vmul.f32 %v670, 0.1
        %v809 = vmul.f32 %v672, 0.1
        %v810 = vmul.f32 %v563, 0.1
        %v811 = vmul.f32 %v565, 0.1
        %v812 = vmul.f32 %v676, 0.1
        %v813 = vmul.f32 %v678, 0.1
        %v814 = vmul.f32 %v567, 0.1
        %v815 = vmul.f32 %v569, 0.1
        %v816 = vmul.f32 %v680, 0.1
        %v817 = vmul.f32 %v682, 0.1
        %v818 = vmul.f32 %v573, 0.1
        %v819 = vmul.f32 %v575, 0.1
        %v820 = vmul.f32 %v686, 0.1
        %v821 = vmul.f32 %v688, 0.1
        %v822 = vmul.f32 %v577, 0.1
        %v823 = vmul.f32 %v579, 0.1
        %v824 = vmul.f32 %v690, 0.1
        %v825 = vmul.f32 %v692, 0.1
        %v826 = vmul.f32 %v583, 0.1
        %v827 = vmul.f32 %v585, 0.1
        %v828 = vmul.f32 %v696, 0.1
        %v829 = vmul.f32 %v698, 0.1
        %v830 = vmul.f32 %v587, 0.1
        %v831 = vmul.f32 %v589, 0.1
        %v832 = vmul.f32 %v700, 0.1
        %v833 = vmul.f32 %v702, 0.1
        %v834 = vmul.f32 %v593, 0.1
        %v835 = vmul.f32 %v595, 0.1
        %v836 = vmul.f32 %v706, 0.1
        %v837 = vmul.f32 %v708, 0.1
        %v838 = vmul.f32 %v597, 0.1
        %v839 = vmul.f32 %v599, 0.1
        %v840 = vmul.f32 %v710, 0.1
        %v841 = vmul.f32 %v712, 0.1
        %v842 = vsel %vm714, %v523, %v778
        %v843 = vsel %vm715, %v525, %v779
        %v844 = vsel %vm716, %v636, %v780
        %v845 = vsel %vm717, %v638, %v781
        %v846 = vsel %vm718, %v527, %v782
        %v847 = vsel %vm719, %v529, %v783
        %v848 = vsel %vm720, %v640, %v784
        %v849 = vsel %vm721, %v642, %v785
        %v850 = vsel %vm722, %v533, %v786
        %v851 = vsel %vm723, %v535, %v787
        %v852 = vsel %vm724, %v646, %v788
        %v853 = vsel %vm725, %v648, %v789
        %v854 = vsel %vm726, %v537, %v790
        %v855 = vsel %vm727, %v539, %v791
        %v856 = vsel %vm728, %v650, %v792
        %v857 = vsel %vm729, %v652, %v793
        %v858 = vsel %vm730, %v543, %v794
        %v859 = vsel %vm731, %v545, %v795
        %v860 = vsel %vm732, %v656, %v796
        %v861 = vsel %vm733, %v658, %v797
        %v862 = vsel %vm734, %v547, %v798
        %v863 = vsel %vm735, %v549, %v799
        %v864 = vsel %vm736, %v660, %v800
        %v865 = vsel %vm737, %v662, %v801
        %v866 = vsel %vm738, %v553, %v802
        %v867 = vsel %vm739, %v555, %v803
        %v868 = vsel %vm740, %v666, %v804
        %v869 = vsel %vm741, %v668, %v805
        %v870 = vsel %vm742, %v557, %v806
        %v871 = vsel %vm743, %v559, %v807
        %v872 = vsel %vm744, %v670, %v808
        %v873 = vsel %vm745, %v672, %v809
        %v874 = vsel %vm746, %v563, %v810
        %v875 = vsel %vm747, %v565, %v811
        %v876 = vsel %vm748, %v676, %v812
        %v877 = vsel %vm749, %v678, %v813
        %v878 = vsel %vm750, %v567, %v814
        %v879 = vsel %vm751, %v569, %v815
        %v880 = vsel %vm752, %v680, %v816
        %v881 = vsel %vm753, %v682, %v817
        %v882 = vsel %vm754, %v573, %v818
        %v883 = vsel %vm755, %v575, %v819
        %v884 = vsel %vm756, %v686, %v820
        %v885 = vsel %vm757, %v688, %v821
        %v886 = vsel %vm758, %v577, %v822
        %v887 = vsel %vm759, %v579, %v823
        %v888 = vsel %vm760, %v690, %v824
        %v889 = vsel %vm761, %v692, %v825
        %v890 = vsel %vm762, %v583, %v826
        %v891 = vsel %vm763, %v585, %v827
        %v892 = vsel %vm764, %v696, %v828
        %v893 = vsel %vm765, %v698, %v829
        %v894 = vsel %vm766, %v587, %v830
        %v895 = vsel %vm767, %v589, %v831
        %v896 = vsel %vm768, %v700, %v832
        %v897 = vsel %vm769, %v702, %v833
        %v898 = vsel %vm770, %v593, %v834
        %v899 = vsel %vm771, %v595, %v835
        %v900 = vsel %vm772, %v706, %v836
        %v901 = vsel %vm773, %v708, %v837
        %v902 = vsel %vm774, %v597, %v838
        %v903 = vsel %vm775, %v599, %v839
        %v904 = vsel %vm776, %v710, %v840
        %v905 = vsel %vm777, %v712, %v841
        %v906 = vpack.c.bf16 %v846, %v842
        %v907 = vpack.c.bf16 %v847, %v843
        %v908 = vpack.c.bf16 %v848, %v844
        %v909 = vpack.c.bf16 %v849, %v845
        %v910 = vpack.c.bf16 %v854, %v850
        %v911 = vpack.c.bf16 %v855, %v851
        %v912 = vpack.c.bf16 %v856, %v852
        %v913 = vpack.c.bf16 %v857, %v853
        %v914 = vpack.c.bf16 %v862, %v858
        %v915 = vpack.c.bf16 %v863, %v859
        %v916 = vpack.c.bf16 %v864, %v860
        %v917 = vpack.c.bf16 %v865, %v861
        %v918 = vpack.c.bf16 %v870, %v866
        %v919 = vpack.c.bf16 %v871, %v867
        %v920 = vpack.c.bf16 %v872, %v868
        %v921 = vpack.c.bf16 %v873, %v869
        %v922 = vpack.c.bf16 %v878, %v874
        %v923 = vpack.c.bf16 %v879, %v875
        %v924 = vpack.c.bf16 %v880, %v876
        %v925 = vpack.c.bf16 %v881, %v877
        %v926 = vpack.c.bf16 %v886, %v882
        %v927 = vpack.c.bf16 %v887, %v883
        %v928 = vpack.c.bf16 %v888, %v884
        %v929 = vpack.c.bf16 %v889, %v885
        %v930 = vpack.c.bf16 %v894, %v890
        %v931 = vpack.c.bf16 %v895, %v891
        %v932 = vpack.c.bf16 %v896, %v892
        %v933 = vpack.c.bf16 %v897, %v893
        %v934 = vpack.c.bf16 %v902, %v898
        %v935 = vpack.c.bf16 %v903, %v899
        %v936 = vpack.c.bf16 %v904, %v900
        %v937 = vpack.c.bf16 %v905, %v901
        %v938 = vld [vmem:[#allocation2] sm:$0xff]
        %v939 = vld [vmem:[#allocation2 + $0x8] sm:$0xff]
        %v940 = vld [vmem:[#allocation2 + $0x10] sm:$0xff]
        %v941 = vld [vmem:[#allocation2 + $0x18] sm:$0xff]
        %v942 = vld [vmem:[#allocation2 + $0x20] sm:$0xff]
        %v943 = vld [vmem:[#allocation2 + $0x28] sm:$0xff]
        %v944 = vld [vmem:[#allocation2 + $0x30] sm:$0xff]
        %v945 = vld [vmem:[#allocation2 + $0x38] sm:$0xff]
        %v946 = vld [vmem:[#allocation2 + $0x40] sm:$0xff]
        %v947 = vld [vmem:[#allocation2 + $0x48] sm:$0xff]
        %v948 = vld [vmem:[#allocation2 + $0x50] sm:$0xff]
        %v949 = vld [vmem:[#allocation2 + $0x58] sm:$0xff]
        %v950 = vld [vmem:[#allocation2 + $0x60] sm:$0xff]
        %v951 = vld [vmem:[#allocation2 + $0x68] sm:$0xff]
        %v952 = vld [vmem:[#allocation2 + $0x70] sm:$0xff]
        %v953 = vld [vmem:[#allocation2 + $0x78] sm:$0xff]
        %v954 = vld [vmem:[#allocation2 + $0x80] sm:$0xff]
        %v955 = vld [vmem:[#allocation2 + $0x88] sm:$0xff]
        %v956 = vld [vmem:[#allocation2 + $0x90] sm:$0xff]
        %v957 = vld [vmem:[#allocation2 + $0x98] sm:$0xff]
        %v958 = vld [vmem:[#allocation2 + $0xa0] sm:$0xff]
        %v959 = vld [vmem:[#allocation2 + $0xa8] sm:$0xff]
        %v960 = vld [vmem:[#allocation2 + $0xb0] sm:$0xff]
        %v961 = vld [vmem:[#allocation2 + $0xb8] sm:$0xff]
        %v962 = vld [vmem:[#allocation2 + $0xc0] sm:$0xff]
        %v963 = vld [vmem:[#allocation2 + $0xc8] sm:$0xff]
        %v964 = vld [vmem:[#allocation2 + $0xd0] sm:$0xff]
        %v965 = vld [vmem:[#allocation2 + $0xd8] sm:$0xff]
        %v966 = vld [vmem:[#allocation2 + $0xe0] sm:$0xff]
        %v967 = vld [vmem:[#allocation2 + $0xe8] sm:$0xff]
        %v968 = vld [vmem:[#allocation2 + $0xf0] sm:$0xff]
        %v969 = vld [vmem:[#allocation2 + $0xf8] sm:$0xff]
        %v970 = vld [vmem:[#allocation2 + $0x100] sm:$0xff]
        %v971 = vld [vmem:[#allocation2 + $0x108] sm:$0xff]
        %v972 = vld [vmem:[#allocation2 + $0x110] sm:$0xff]
        %v973 = vld [vmem:[#allocation2 + $0x118] sm:$0xff]
        %v974 = vld [vmem:[#allocation2 + $0x120] sm:$0xff]
        %v975 = vld [vmem:[#allocation2 + $0x128] sm:$0xff]
        %v976 = vld [vmem:[#allocation2 + $0x130] sm:$0xff]
        %v977 = vld [vmem:[#allocation2 + $0x138] sm:$0xff]
        %v978 = vld [vmem:[#allocation2 + $0x140] sm:$0xff]
        %v979 = vld [vmem:[#allocation2 + $0x148] sm:$0xff]
        %v980 = vld [vmem:[#allocation2 + $0x150] sm:$0xff]
        %v981 = vld [vmem:[#allocation2 + $0x158] sm:$0xff]
        %v982 = vld [vmem:[#allocation2 + $0x160] sm:$0xff]
        %v983 = vld [vmem:[#allocation2 + $0x168] sm:$0xff]
        %v984 = vld [vmem:[#allocation2 + $0x170] sm:$0xff]
        %v985 = vld [vmem:[#allocation2 + $0x178] sm:$0xff]
        %v986 = vld [vmem:[#allocation2 + $0x180] sm:$0xff]
        %v987 = vld [vmem:[#allocation2 + $0x188] sm:$0xff]
        %v988 = vld [vmem:[#allocation2 + $0x190] sm:$0xff]
        %v989 = vld [vmem:[#allocation2 + $0x198] sm:$0xff]
        %v990 = vld [vmem:[#allocation2 + $0x1a0] sm:$0xff]
        %v991 = vld [vmem:[#allocation2 + $0x1a8] sm:$0xff]
        %v992 = vld [vmem:[#allocation2 + $0x1b0] sm:$0xff]
        %v993 = vld [vmem:[#allocation2 + $0x1b8] sm:$0xff]
        %v994 = vld [vmem:[#allocation2 + $0x1c0] sm:$0xff]
        %v995 = vld [vmem:[#allocation2 + $0x1c8] sm:$0xff]
        %v996 = vld [vmem:[#allocation2 + $0x1d0] sm:$0xff]
        %v997 = vld [vmem:[#allocation2 + $0x1d8] sm:$0xff]
        %v998 = vld [vmem:[#allocation2 + $0x1e0] sm:$0xff]
        %v999 = vld [vmem:[#allocation2 + $0x1e8] sm:$0xff]
        %v1000 = vld [vmem:[#allocation2 + $0x1f0] sm:$0xff]
        %v1001 = vld [vmem:[#allocation2 + $0x1f8] sm:$0xff]
        %v1002 = vld [vmem:[%s4] sm:$0x3]
        %v1004 = vlaneseq
        %v1005 = vshrl.u32 %v1004, 7
        %v1006 = vsub.s32 0, %v1005
        %v1007 = vrot.slane %v1002, %v1006
        %v1008 = vlaneseq
        %v1009 = vshrl.u32 %v1008, 7
        %v1010 = vsub.s32 1, %v1009
        %v1011 = vrot.slane %v1002, %v1010
        %v1078 = vunpack.c.l.b16 %v938
        %v1079 = vunpack.c.h.b16 %v938
        %v1080 = vunpack.c.l.b16 %v939
        %v1081 = vunpack.c.h.b16 %v939
        %v1082 = vunpack.c.l.b16 %v940
        %v1083 = vunpack.c.h.b16 %v940
        %v1084 = vunpack.c.l.b16 %v941
        %v1085 = vunpack.c.h.b16 %v941
        %v1086 = vunpack.c.l.b16 %v942
        %v1087 = vunpack.c.h.b16 %v942
        %v1088 = vunpack.c.l.b16 %v943
        %v1089 = vunpack.c.h.b16 %v943
        %v1090 = vunpack.c.l.b16 %v944
        %v1091 = vunpack.c.h.b16 %v944
        %v1092 = vunpack.c.l.b16 %v945
        %v1093 = vunpack.c.h.b16 %v945
        %v1094 = vunpack.c.l.b16 %v946
        %v1095 = vunpack.c.h.b16 %v946
        %v1096 = vunpack.c.l.b16 %v947
        %v1097 = vunpack.c.h.b16 %v947
        %v1098 = vunpack.c.l.b16 %v948
        %v1099 = vunpack.c.h.b16 %v948
        %v1100 = vunpack.c.l.b16 %v949
        %v1101 = vunpack.c.h.b16 %v949
        %v1102 = vunpack.c.l.b16 %v950
        %v1103 = vunpack.c.h.b16 %v950
        %v1104 = vunpack.c.l.b16 %v951
        %v1105 = vunpack.c.h.b16 %v951
        %v1106 = vunpack.c.l.b16 %v952
        %v1107 = vunpack.c.h.b16 %v952
        %v1108 = vunpack.c.l.b16 %v953
        %v1109 = vunpack.c.h.b16 %v953
        %v1110 = vunpack.c.l.b16 %v954
        %v1111 = vunpack.c.h.b16 %v954
        %v1112 = vunpack.c.l.b16 %v955
        %v1113 = vunpack.c.h.b16 %v955
        %v1114 = vunpack.c.l.b16 %v956
        %v1115 = vunpack.c.h.b16 %v956
        %v1116 = vunpack.c.l.b16 %v957
        %v1117 = vunpack.c.h.b16 %v957
        %v1118 = vunpack.c.l.b16 %v958
        %v1119 = vunpack.c.h.b16 %v958
        %v1120 = vunpack.c.l.b16 %v959
        %v1121 = vunpack.c.h.b16 %v959
        %v1122 = vunpack.c.l.b16 %v960
        %v1123 = vunpack.c.h.b16 %v960
        %v1124 = vunpack.c.l.b16 %v961
        %v1125 = vunpack.c.h.b16 %v961
        %v1126 = vunpack.c.l.b16 %v962
        %v1127 = vunpack.c.h.b16 %v962
        %v1128 = vunpack.c.l.b16 %v963
        %v1129 = vunpack.c.h.b16 %v963
        %v1130 = vunpack.c.l.b16 %v964
        %v1131 = vunpack.c.h.b16 %v964
        %v1132 = vunpack.c.l.b16 %v965
        %v1133 = vunpack.c.h.b16 %v965
        %v1134 = vunpack.c.l.b16 %v966
        %v1135 = vunpack.c.h.b16 %v966
        %v1136 = vunpack.c.l.b16 %v967
        %v1137 = vunpack.c.h.b16 %v967
        %v1138 = vunpack.c.l.b16 %v968
        %v1139 = vunpack.c.h.b16 %v968
        %v1140 = vunpack.c.l.b16 %v969
        %v1141 = vunpack.c.h.b16 %v969
        %v1142 = vunpack.c.l.b16 %v970
        %v1143 = vunpack.c.h.b16 %v970
        %v1144 = vunpack.c.l.b16 %v971
        %v1145 = vunpack.c.h.b16 %v971
        %v1146 = vunpack.c.l.b16 %v972
        %v1147 = vunpack.c.h.b16 %v972
        %v1148 = vunpack.c.l.b16 %v973
        %v1149 = vunpack.c.h.b16 %v973
        %v1150 = vunpack.c.l.b16 %v974
        %v1151 = vunpack.c.h.b16 %v974
        %v1152 = vunpack.c.l.b16 %v975
        %v1153 = vunpack.c.h.b16 %v975
        %v1154 = vunpack.c.l.b16 %v976
        %v1155 = vunpack.c.h.b16 %v976
        %v1156 = vunpack.c.l.b16 %v977
        %v1157 = vunpack.c.h.b16 %v977
        %v1158 = vunpack.c.l.b16 %v978
        %v1159 = vunpack.c.h.b16 %v978
        %v1160 = vunpack.c.l.b16 %v979
        %v1161 = vunpack.c.h.b16 %v979
        %v1162 = vunpack.c.l.b16 %v980
        %v1163 = vunpack.c.h.b16 %v980
        %v1164 = vunpack.c.l.b16 %v981
        %v1165 = vunpack.c.h.b16 %v981
        %v1166 = vunpack.c.l.b16 %v982
        %v1167 = vunpack.c.h.b16 %v982
        %v1168 = vunpack.c.l.b16 %v983
        %v1169 = vunpack.c.h.b16 %v983
        %v1170 = vunpack.c.l.b16 %v984
        %v1171 = vunpack.c.h.b16 %v984
        %v1172 = vunpack.c.l.b16 %v985
        %v1173 = vunpack.c.h.b16 %v985
        %v1174 = vunpack.c.l.b16 %v986
        %v1175 = vunpack.c.h.b16 %v986
        %v1176 = vunpack.c.l.b16 %v987
        %v1177 = vunpack.c.h.b16 %v987
        %v1178 = vunpack.c.l.b16 %v988
        %v1179 = vunpack.c.h.b16 %v988
        %v1180 = vunpack.c.l.b16 %v989
        %v1181 = vunpack.c.h.b16 %v989
        %v1182 = vunpack.c.l.b16 %v990
        %v1183 = vunpack.c.h.b16 %v990
        %v1184 = vunpack.c.l.b16 %v991
        %v1185 = vunpack.c.h.b16 %v991
        %v1186 = vunpack.c.l.b16 %v992
        %v1187 = vunpack.c.h.b16 %v992
        %v1188 = vunpack.c.l.b16 %v993
        %v1189 = vunpack.c.h.b16 %v993
        %v1190 = vunpack.c.l.b16 %v994
        %v1191 = vunpack.c.h.b16 %v994
        %v1192 = vunpack.c.l.b16 %v995
        %v1193 = vunpack.c.h.b16 %v995
        %v1194 = vunpack.c.l.b16 %v996
        %v1195 = vunpack.c.h.b16 %v996
        %v1196 = vunpack.c.l.b16 %v997
        %v1197 = vunpack.c.h.b16 %v997
        %v1198 = vunpack.c.l.b16 %v998
        %v1199 = vunpack.c.h.b16 %v998
        %v1200 = vunpack.c.l.b16 %v999
        %v1201 = vunpack.c.h.b16 %v999
        %v1202 = vunpack.c.l.b16 %v1000
        %v1203 = vunpack.c.h.b16 %v1000
        %v1204 = vunpack.c.l.b16 %v1001
        %v1205 = vunpack.c.h.b16 %v1001
        %v1206 = vpack.c.b16 %v1080, %v1078
        %v1207 = vpack.c.b16 %v1081, %v1079
        %v1208 = vpack.c.b16 %v1084, %v1082
        %v1209 = vpack.c.b16 %v1085, %v1083
        %v1210 = vpack.c.b16 %v1088, %v1086
        %v1211 = vpack.c.b16 %v1089, %v1087
        %v1212 = vpack.c.b16 %v1092, %v1090
        %v1213 = vpack.c.b16 %v1093, %v1091
        %v1214 = vpack.c.b16 %v1096, %v1094
        %v1215 = vpack.c.b16 %v1097, %v1095
        %v1216 = vpack.c.b16 %v1100, %v1098
        %v1217 = vpack.c.b16 %v1101, %v1099
        %v1218 = vpack.c.b16 %v1104, %v1102
        %v1219 = vpack.c.b16 %v1105, %v1103
        %v1220 = vpack.c.b16 %v1108, %v1106
        %v1221 = vpack.c.b16 %v1109, %v1107
        %v1222 = vpack.c.b16 %v1112, %v1110
        %v1223 = vpack.c.b16 %v1113, %v1111
        %v1224 = vpack.c.b16 %v1116, %v1114
        %v1225 = vpack.c.b16 %v1117, %v1115
        %v1226 = vpack.c.b16 %v1120, %v1118
        %v1227 = vpack.c.b16 %v1121, %v1119
        %v1228 = vpack.c.b16 %v1124, %v1122
        %v1229 = vpack.c.b16 %v1125, %v1123
        %v1230 = vpack.c.b16 %v1128, %v1126
        %v1231 = vpack.c.b16 %v1129, %v1127
        %v1232 = vpack.c.b16 %v1132, %v1130
        %v1233 = vpack.c.b16 %v1133, %v1131
        %v1234 = vpack.c.b16 %v1136, %v1134
        %v1235 = vpack.c.b16 %v1137, %v1135
        %v1236 = vpack.c.b16 %v1140, %v1138
        %v1237 = vpack.c.b16 %v1141, %v1139
        %v1238 = vpack.c.b16 %v1144, %v1142
        %v1239 = vpack.c.b16 %v1145, %v1143
        %v1240 = vpack.c.b16 %v1148, %v1146
        %v1241 = vpack.c.b16 %v1149, %v1147
        %v1242 = vpack.c.b16 %v1152, %v1150
        %v1243 = vpack.c.b16 %v1153, %v1151
        %v1244 = vpack.c.b16 %v1156, %v1154
        %v1245 = vpack.c.b16 %v1157, %v1155
        %v1246 = vpack.c.b16 %v1160, %v1158
        %v1247 = vpack.c.b16 %v1161, %v1159
        %v1248 = vpack.c.b16 %v1164, %v1162
        %v1249 = vpack.c.b16 %v1165, %v1163
        %v1250 = vpack.c.b16 %v1168, %v1166
        %v1251 = vpack.c.b16 %v1169, %v1167
        %v1252 = vpack.c.b16 %v1172, %v1170
        %v1253 = vpack.c.b16 %v1173, %v1171
        %v1254 = vpack.c.b16 %v1176, %v1174
        %v1255 = vpack.c.b16 %v1177, %v1175
        %v1256 = vpack.c.b16 %v1180, %v1178
        %v1257 = vpack.c.b16 %v1181, %v1179
        %v1258 = vpack.c.b16 %v1184, %v1182
        %v1259 = vpack.c.b16 %v1185, %v1183
        %v1260 = vpack.c.b16 %v1188, %v1186
        %v1261 = vpack.c.b16 %v1189, %v1187
        %v1262 = vpack.c.b16 %v1192, %v1190
        %v1263 = vpack.c.b16 %v1193, %v1191
        %v1264 = vpack.c.b16 %v1196, %v1194
        %v1265 = vpack.c.b16 %v1197, %v1195
        %v1266 = vpack.c.b16 %v1200, %v1198
        %v1267 = vpack.c.b16 %v1201, %v1199
        %v1268 = vpack.c.b16 %v1204, %v1202
        %v1269 = vpack.c.b16 %v1205, %v1203
        %1334 = vmatprep.subr.bf16.mxu0 %v1207
        %1335 = vmatpush1.bf16.msra.mxu0 %v1206
        %1336 = vmatprep.subr.bf16.mxu0 %v1209
        %1337 = vmatpush1.bf16.msra.mxu0 %v1208
        %1338 = vmatprep.subr.bf16.mxu0 %v1211
        %1339 = vmatpush1.bf16.msra.mxu0 %v1210
        %1340 = vmatprep.subr.bf16.mxu0 %v1213
        %1341 = vmatpush1.bf16.msra.mxu0 %v1212
        %1342 = vmatprep.subr.bf16.mxu0 %v1215
        %1343 = vmatpush1.bf16.msra.mxu0 %v1214
        %1344 = vmatprep.subr.bf16.mxu0 %v1217
        %1345 = vmatpush1.bf16.msra.mxu0 %v1216
        %1346 = vmatprep.subr.bf16.mxu0 %v1219
        %1347 = vmatpush1.bf16.msra.mxu0 %v1218
        %1348 = vmatprep.subr.bf16.mxu0 %v1221
        %1349 = vmatpush1.bf16.msra.mxu0 %v1220
        %1350 = vmatprep.subr.bf16.mxu0 %v1223
        %1351 = vmatpush1.bf16.msra.mxu0 %v1222
        %1352 = vmatprep.subr.bf16.mxu0 %v1225
        %1353 = vmatpush1.bf16.msra.mxu0 %v1224
        %1354 = vmatprep.subr.bf16.mxu0 %v1227
        %1355 = vmatpush1.bf16.msra.mxu0 %v1226
        %1356 = vmatprep.subr.bf16.mxu0 %v1229
        %1357 = vmatpush1.bf16.msra.mxu0 %v1228
        %1358 = vmatprep.subr.bf16.mxu0 %v1231
        %1359 = vmatpush1.bf16.msra.mxu0 %v1230
        %1360 = vmatprep.subr.bf16.mxu0 %v1233
        %1361 = vmatpush1.bf16.msra.mxu0 %v1232
        %1362 = vmatprep.subr.bf16.mxu0 %v1235
        %1363 = vmatpush1.bf16.msra.mxu0 %v1234
        %1364 = vmatprep.subr.bf16.mxu0 %v1237
        %1365 = vmatpush1.bf16.msra.mxu0 %v1236
        %1366 = vmatprep.mubr.bf16.mxu0 %v907
        %1367 = vmatmul.mubr.bf16.gmra.mrb[0].mxu0 %v906
        %v1368 = vpop.f32.mrb[0].mxu0
        %v1369 = vadd.f32 %v1007, %v1368
        %v1370 = vpop.f32.mrb[0].mxu0
        %v1371 = vadd.f32 %v1011, %v1370
        %v1372 = vpop.f32.mrb[0].mxu0
        %v1373 = vadd.f32 %v1007, %v1372
        %v1374 = vpop.f32.mrb[0].mxu0
        %v1375 = vadd.f32 %v1011, %v1374
        %1376 = vmatprep.mubr.bf16.mxu0 %v911
        %1377 = vmatmul.mubr.bf16.gmra.mrb[0].mxu0 %v910
        %v1378 = vpop.f32.mrb[0].mxu0
        %v1379 = vadd.f32 %v1007, %v1378
        %v1380 = vpop.f32.mrb[0].mxu0
        %v1381 = vadd.f32 %v1011, %v1380
        %v1382 = vpop.f32.mrb[0].mxu0
        %v1383 = vadd.f32 %v1007, %v1382
        %v1384 = vpop.f32.mrb[0].mxu0
        %v1385 = vadd.f32 %v1011, %v1384
        %1386 = vmatprep.mubr.bf16.mxu0 %v915
        %1387 = vmatmul.mubr.bf16.gmra.mrb[0].mxu0 %v914
        %v1388 = vpop.f32.mrb[0].mxu0
        %v1389 = vadd.f32 %v1007, %v1388
        %v1390 = vpop.f32.mrb[0].mxu0
        %v1391 = vadd.f32 %v1011, %v1390
        %v1392 = vpop.f32.mrb[0].mxu0
        %v1393 = vadd.f32 %v1007, %v1392
        %v1394 = vpop.f32.mrb[0].mxu0
        %v1395 = vadd.f32 %v1011, %v1394
        %1396 = vmatprep.mubr.bf16.mxu0 %v919
        %1397 = vmatmul.mubr.bf16.gmra.mrb[0].mxu0 %v918
        %v1398 = vpop.f32.mrb[0].mxu0
        %v1399 = vadd.f32 %v1007, %v1398
        %v1400 = vpop.f32.mrb[0].mxu0
        %v1401 = vadd.f32 %v1011, %v1400
        %v1402 = vpop.f32.mrb[0].mxu0
        %v1403 = vadd.f32 %v1007, %v1402
        %v1404 = vpop.f32.mrb[0].mxu0
        %v1405 = vadd.f32 %v1011, %v1404
        %1406 = vmatprep.mubr.bf16.mxu0 %v923
        %1407 = vmatmul.mubr.bf16.gmra.mrb[0].mxu0 %v922
        %v1408 = vpop.f32.mrb[0].mxu0
        %v1409 = vadd.f32 %v1007, %v1408
        %v1410 = vpop.f32.mrb[0].mxu0
        %v1411 = vadd.f32 %v1011, %v1410
        %v1412 = vpop.f32.mrb[0].mxu0
        %v1413 = vadd.f32 %v1007, %v1412
        %v1414 = vpop.f32.mrb[0].mxu0
        %v1415 = vadd.f32 %v1011, %v1414
        %1416 = vmatprep.mubr.bf16.mxu0 %v927
        %1417 = vmatmul.mubr.bf16.gmra.mrb[0].mxu0 %v926
        %v1418 = vpop.f32.mrb[0].mxu0
        %v1419 = vadd.f32 %v1007, %v1418
        %v1420 = vpop.f32.mrb[0].mxu0
        %v1421 = vadd.f32 %v1011, %v1420
        %v1422 = vpop.f32.mrb[0].mxu0
        %v1423 = vadd.f32 %v1007, %v1422
        %v1424 = vpop.f32.mrb[0].mxu0
        %v1425 = vadd.f32 %v1011, %v1424
        %1426 = vmatprep.mubr.bf16.mxu0 %v931
        %1427 = vmatmul.mubr.bf16.gmra.mrb[0].mxu0 %v930
        %v1428 = vpop.f32.mrb[0].mxu0
        %v1429 = vadd.f32 %v1007, %v1428
        %v1430 = vpop.f32.mrb[0].mxu0
        %v1431 = vadd.f32 %v1011, %v1430
        %v1432 = vpop.f32.mrb[0].mxu0
        %v1433 = vadd.f32 %v1007, %v1432
        %v1434 = vpop.f32.mrb[0].mxu0
        %v1435 = vadd.f32 %v1011, %v1434
        %1436 = vmatprep.mubr.bf16.mxu0 %v935
        %1437 = vmatmul.mubr.bf16.gmra.mrb[0].mxu0 %v934
        %v1438 = vpop.f32.mrb[0].mxu0
        %v1439 = vadd.f32 %v1007, %v1438
        %v1440 = vpop.f32.mrb[0].mxu0
        %v1441 = vadd.f32 %v1011, %v1440
        %v1442 = vpop.f32.mrb[0].mxu0
        %v1443 = vadd.f32 %v1007, %v1442
        %v1444 = vpop.f32.mrb[0].mxu0
        %v1445 = vadd.f32 %v1011, %v1444
        %1446 = vdwg.mxu0
        %1447 = vmatprep.subr.bf16.mxu0 %v1239
        %1448 = vmatpush1.bf16.msra.mxu0 %v1238
        %1449 = vmatprep.subr.bf16.mxu0 %v1241
        %1450 = vmatpush1.bf16.msra.mxu0 %v1240
        %1451 = vmatprep.subr.bf16.mxu0 %v1243
        %1452 = vmatpush1.bf16.msra.mxu0 %v1242
        %1453 = vmatprep.subr.bf16.mxu0 %v1245
        %1454 = vmatpush1.bf16.msra.mxu0 %v1244
        %1455 = vmatprep.subr.bf16.mxu0 %v1247
        %1456 = vmatpush1.bf16.msra.mxu0 %v1246
        %1457 = vmatprep.subr.bf16.mxu0 %v1249
        %1458 = vmatpush1.bf16.msra.mxu0 %v1248
        %1459 = vmatprep.subr.bf16.mxu0 %v1251
        %1460 = vmatpush1.bf16.msra.mxu0 %v1250
        %1461 = vmatprep.subr.bf16.mxu0 %v1253
        %1462 = vmatpush1.bf16.msra.mxu0 %v1252
        %1463 = vmatprep.subr.bf16.mxu0 %v1255
        %1464 = vmatpush1.bf16.msra.mxu0 %v1254
        %1465 = vmatprep.subr.bf16.mxu0 %v1257
        %1466 = vmatpush1.bf16.msra.mxu0 %v1256
        %1467 = vmatprep.subr.bf16.mxu0 %v1259
        %1468 = vmatpush1.bf16.msra.mxu0 %v1258
        %1469 = vmatprep.subr.bf16.mxu0 %v1261
        %1470 = vmatpush1.bf16.msra.mxu0 %v1260
        %1471 = vmatprep.subr.bf16.mxu0 %v1263
        %1472 = vmatpush1.bf16.msra.mxu0 %v1262
        %1473 = vmatprep.subr.bf16.mxu0 %v1265
        %1474 = vmatpush1.bf16.msra.mxu0 %v1264
        %1475 = vmatprep.subr.bf16.mxu0 %v1267
        %1476 = vmatpush1.bf16.msra.mxu0 %v1266
        %1477 = vmatprep.subr.bf16.mxu0 %v1269
        %1478 = vmatpush1.bf16.msra.mxu0 %v1268
        %1479 = vmatprep.mubr.bf16.mxu0 %v909
        %1480 = vmatmul.mubr.bf16.gmra.mrb[0].mxu0 %v908
        %v1481 = vpop.f32.mrb[0].mxu0
        %v1482 = vadd.f32 %v1369, %v1481
        %v1483 = vpop.f32.mrb[0].mxu0
        %v1484 = vadd.f32 %v1371, %v1483
        %v1485 = vpop.f32.mrb[0].mxu0
        %v1486 = vadd.f32 %v1373, %v1485
        %v1487 = vpop.f32.mrb[0].mxu0
        %v1488 = vadd.f32 %v1375, %v1487
        %1489 = vmatprep.mubr.bf16.mxu0 %v913
        %1490 = vmatmul.mubr.bf16.gmra.mrb[0].mxu0 %v912
        %v1491 = vpop.f32.mrb[0].mxu0
        %v1492 = vadd.f32 %v1379, %v1491
        %v1493 = vpop.f32.mrb[0].mxu0
        %v1494 = vadd.f32 %v1381, %v1493
        %v1495 = vpop.f32.mrb[0].mxu0
        %v1496 = vadd.f32 %v1383, %v1495
        %v1497 = vpop.f32.mrb[0].mxu0
        %v1498 = vadd.f32 %v1385, %v1497
        %1499 = vmatprep.mubr.bf16.mxu0 %v917
        %1500 = vmatmul.mubr.bf16.gmra.mrb[0].mxu0 %v916
        %v1501 = vpop.f32.mrb[0].mxu0
        %v1502 = vadd.f32 %v1389, %v1501
        %v1503 = vpop.f32.mrb[0].mxu0
        %v1504 = vadd.f32 %v1391, %v1503
        %v1505 = vpop.f32.mrb[0].mxu0
        %v1506 = vadd.f32 %v1393, %v1505
        %v1507 = vpop.f32.mrb[0].mxu0
        %v1508 = vadd.f32 %v1395, %v1507
        %1509 = vmatprep.mubr.bf16.mxu0 %v921
        %1510 = vmatmul.mubr.bf16.gmra.mrb[0].mxu0 %v920
        %v1511 = vpop.f32.mrb[0].mxu0
        %v1512 = vadd.f32 %v1399, %v1511
        %v1513 = vpop.f32.mrb[0].mxu0
        %v1514 = vadd.f32 %v1401, %v1513
        %v1515 = vpop.f32.mrb[0].mxu0
        %v1516 = vadd.f32 %v1403, %v1515
        %v1517 = vpop.f32.mrb[0].mxu0
        %v1518 = vadd.f32 %v1405, %v1517
        %1519 = vmatprep.mubr.bf16.mxu0 %v925
        %1520 = vmatmul.mubr.bf16.gmra.mrb[0].mxu0 %v924
        %v1521 = vpop.f32.mrb[0].mxu0
        %v1522 = vadd.f32 %v1409, %v1521
        %v1523 = vpop.f32.mrb[0].mxu0
        %v1524 = vadd.f32 %v1411, %v1523
        %v1525 = vpop.f32.mrb[0].mxu0
        %v1526 = vadd.f32 %v1413, %v1525
        %v1527 = vpop.f32.mrb[0].mxu0
        %v1528 = vadd.f32 %v1415, %v1527
        %1529 = vmatprep.mubr.bf16.mxu0 %v929
        %1530 = vmatmul.mubr.bf16.gmra.mrb[0].mxu0 %v928
        %v1531 = vpop.f32.mrb[0].mxu0
        %v1532 = vadd.f32 %v1419, %v1531
        %v1533 = vpop.f32.mrb[0].mxu0
        %v1534 = vadd.f32 %v1421, %v1533
        %v1535 = vpop.f32.mrb[0].mxu0
        %v1536 = vadd.f32 %v1423, %v1535
        %v1537 = vpop.f32.mrb[0].mxu0
        %v1538 = vadd.f32 %v1425, %v1537
        %1539 = vmatprep.mubr.bf16.mxu0 %v933
        %1540 = vmatmul.mubr.bf16.gmra.mrb[0].mxu0 %v932
        %v1541 = vpop.f32.mrb[0].mxu0
        %v1542 = vadd.f32 %v1429, %v1541
        %v1543 = vpop.f32.mrb[0].mxu0
        %v1544 = vadd.f32 %v1431, %v1543
        %v1545 = vpop.f32.mrb[0].mxu0
        %v1546 = vadd.f32 %v1433, %v1545
        %v1547 = vpop.f32.mrb[0].mxu0
        %v1548 = vadd.f32 %v1435, %v1547
        %1549 = vmatprep.mubr.bf16.mxu0 %v937
        %1550 = vmatmul.mubr.bf16.gmra.mrb[0].mxu0 %v936
        %v1551 = vpop.f32.mrb[0].mxu0
        %v1552 = vadd.f32 %v1439, %v1551
        %v1553 = vpop.f32.mrb[0].mxu0
        %v1554 = vadd.f32 %v1441, %v1553
        %v1555 = vpop.f32.mrb[0].mxu0
        %v1556 = vadd.f32 %v1443, %v1555
        %v1557 = vpop.f32.mrb[0].mxu0
        %v1558 = vadd.f32 %v1445, %v1557
        %1559 = vdwg.mxu0
        %vm1560 = vcmp.gt.f32.partialorder %v1482, 0.0
        %vm1561 = vcmp.gt.f32.partialorder %v1484, 0.0
        %vm1562 = vcmp.gt.f32.partialorder %v1486, 0.0
        %vm1563 = vcmp.gt.f32.partialorder %v1488, 0.0
        %vm1564 = vcmp.gt.f32.partialorder %v1492, 0.0
        %vm1565 = vcmp.gt.f32.partialorder %v1494, 0.0
        %vm1566 = vcmp.gt.f32.partialorder %v1496, 0.0
        %vm1567 = vcmp.gt.f32.partialorder %v1498, 0.0
        %vm1568 = vcmp.gt.f32.partialorder %v1502, 0.0
        %vm1569 = vcmp.gt.f32.partialorder %v1504, 0.0
        %vm1570 = vcmp.gt.f32.partialorder %v1506, 0.0
        %vm1571 = vcmp.gt.f32.partialorder %v1508, 0.0
        %vm1572 = vcmp.gt.f32.partialorder %v1512, 0.0
        %vm1573 = vcmp.gt.f32.partialorder %v1514, 0.0
        %vm1574 = vcmp.gt.f32.partialorder %v1516, 0.0
        %vm1575 = vcmp.gt.f32.partialorder %v1518, 0.0
        %vm1576 = vcmp.gt.f32.partialorder %v1522, 0.0
        %vm1577 = vcmp.gt.f32.partialorder %v1524, 0.0
        %vm1578 = vcmp.gt.f32.partialorder %v1526, 0.0
        %vm1579 = vcmp.gt.f32.partialorder %v1528, 0.0
        %vm1580 = vcmp.gt.f32.partialorder %v1532, 0.0
        %vm1581 = vcmp.gt.f32.partialorder %v1534, 0.0
        %vm1582 = vcmp.gt.f32.partialorder %v1536, 0.0
        %vm1583 = vcmp.gt.f32.partialorder %v1538, 0.0
        %vm1584 = vcmp.gt.f32.partialorder %v1542, 0.0
        %vm1585 = vcmp.gt.f32.partialorder %v1544, 0.0
        %vm1586 = vcmp.gt.f32.partialorder %v1546, 0.0
        %vm1587 = vcmp.gt.f32.partialorder %v1548, 0.0
        %vm1588 = vcmp.gt.f32.partialorder %v1552, 0.0
        %vm1589 = vcmp.gt.f32.partialorder %v1554, 0.0
        %vm1590 = vcmp.gt.f32.partialorder %v1556, 0.0
        %vm1591 = vcmp.gt.f32.partialorder %v1558, 0.0
        %v1592 = vmul.f32 %v1482, 0.1
        %v1593 = vmul.f32 %v1484, 0.1
        %v1594 = vmul.f32 %v1486, 0.1
        %v1595 = vmul.f32 %v1488, 0.1
        %v1596 = vmul.f32 %v1492, 0.1
        %v1597 = vmul.f32 %v1494, 0.1
        %v1598 = vmul.f32 %v1496, 0.1
        %v1599 = vmul.f32 %v1498, 0.1
        %v1600 = vmul.f32 %v1502, 0.1
        %v1601 = vmul.f32 %v1504, 0.1
        %v1602 = vmul.f32 %v1506, 0.1
        %v1603 = vmul.f32 %v1508, 0.1
        %v1604 = vmul.f32 %v1512, 0.1
        %v1605 = vmul.f32 %v1514, 0.1
        %v1606 = vmul.f32 %v1516, 0.1
        %v1607 = vmul.f32 %v1518, 0.1
        %v1608 = vmul.f32 %v1522, 0.1
        %v1609 = vmul.f32 %v1524, 0.1
        %v1610 = vmul.f32 %v1526, 0.1
        %v1611 = vmul.f32 %v1528, 0.1
        %v1612 = vmul.f32 %v1532, 0.1
        %v1613 = vmul.f32 %v1534, 0.1
        %v1614 = vmul.f32 %v1536, 0.1
        %v1615 = vmul.f32 %v1538, 0.1
        %v1616 = vmul.f32 %v1542, 0.1
        %v1617 = vmul.f32 %v1544, 0.1
        %v1618 = vmul.f32 %v1546, 0.1
        %v1619 = vmul.f32 %v1548, 0.1
        %v1620 = vmul.f32 %v1552, 0.1
        %v1621 = vmul.f32 %v1554, 0.1
        %v1622 = vmul.f32 %v1556, 0.1
        %v1623 = vmul.f32 %v1558, 0.1
        %v1624 = vsel %vm1560, %v1482, %v1592
        %v1625 = vsel %vm1561, %v1484, %v1593
        %v1626 = vsel %vm1562, %v1486, %v1594
        %v1627 = vsel %vm1563, %v1488, %v1595
        %v1628 = vsel %vm1564, %v1492, %v1596
        %v1629 = vsel %vm1565, %v1494, %v1597
        %v1630 = vsel %vm1566, %v1496, %v1598
        %v1631 = vsel %vm1567, %v1498, %v1599
        %v1632 = vsel %vm1568, %v1502, %v1600
        %v1633 = vsel %vm1569, %v1504, %v1601
        %v1634 = vsel %vm1570, %v1506, %v1602
        %v1635 = vsel %vm1571, %v1508, %v1603
        %v1636 = vsel %vm1572, %v1512, %v1604
        %v1637 = vsel %vm1573, %v1514, %v1605
        %v1638 = vsel %vm1574, %v1516, %v1606
        %v1639 = vsel %vm1575, %v1518, %v1607
        %v1640 = vsel %vm1576, %v1522, %v1608
        %v1641 = vsel %vm1577, %v1524, %v1609
        %v1642 = vsel %vm1578, %v1526, %v1610
        %v1643 = vsel %vm1579, %v1528, %v1611
        %v1644 = vsel %vm1580, %v1532, %v1612
        %v1645 = vsel %vm1581, %v1534, %v1613
        %v1646 = vsel %vm1582, %v1536, %v1614
        %v1647 = vsel %vm1583, %v1538, %v1615
        %v1648 = vsel %vm1584, %v1542, %v1616
        %v1649 = vsel %vm1585, %v1544, %v1617
        %v1650 = vsel %vm1586, %v1546, %v1618
        %v1651 = vsel %vm1587, %v1548, %v1619
        %v1652 = vsel %vm1588, %v1552, %v1620
        %v1653 = vsel %vm1589, %v1554, %v1621
        %v1654 = vsel %vm1590, %v1556, %v1622
        %v1655 = vsel %vm1591, %v1558, %v1623
        %v1656 = vpack.c.bf16 %v1626, %v1624
        %v1657 = vpack.c.bf16 %v1627, %v1625
        %v1658 = vpack.c.bf16 %v1630, %v1628
        %v1659 = vpack.c.bf16 %v1631, %v1629
        %v1660 = vpack.c.bf16 %v1634, %v1632
        %v1661 = vpack.c.bf16 %v1635, %v1633
        %v1662 = vpack.c.bf16 %v1638, %v1636
        %v1663 = vpack.c.bf16 %v1639, %v1637
        %v1664 = vpack.c.bf16 %v1642, %v1640
        %v1665 = vpack.c.bf16 %v1643, %v1641
        %v1666 = vpack.c.bf16 %v1646, %v1644
        %v1667 = vpack.c.bf16 %v1647, %v1645
        %v1668 = vpack.c.bf16 %v1650, %v1648
        %v1669 = vpack.c.bf16 %v1651, %v1649
        %v1670 = vpack.c.bf16 %v1654, %v1652
        %v1671 = vpack.c.bf16 %v1655, %v1653
        %v1672 = vld [vmem:[%s5] sm:$0xff]
        %v1673 = vld [vmem:[%s5 + $0x8] sm:$0xff]
        %v1674 = vld [vmem:[%s5 + $0x10] sm:$0xff]
        %v1675 = vld [vmem:[%s5 + $0x18] sm:$0xff]
        %v1676 = vld [vmem:[%s5 + $0x20] sm:$0xff]
        %v1677 = vld [vmem:[%s5 + $0x28] sm:$0xff]
        %v1678 = vld [vmem:[%s5 + $0x30] sm:$0xff]
        %v1679 = vld [vmem:[%s5 + $0x38] sm:$0xff]
        %v1680 = vld [vmem:[%s5 + $0x40] sm:$0xff]
        %v1681 = vld [vmem:[%s5 + $0x48] sm:$0xff]
        %v1682 = vld [vmem:[%s5 + $0x50] sm:$0xff]
        %v1683 = vld [vmem:[%s5 + $0x58] sm:$0xff]
        %v1684 = vld [vmem:[%s5 + $0x60] sm:$0xff]
        %v1685 = vld [vmem:[%s5 + $0x68] sm:$0xff]
        %v1686 = vld [vmem:[%s5 + $0x70] sm:$0xff]
        %v1687 = vld [vmem:[%s5 + $0x78] sm:$0xff]
        %v1688 = vld [vmem:[%s5 + $0x80] sm:$0xff]
        %v1689 = vld [vmem:[%s5 + $0x88] sm:$0xff]
        %v1690 = vld [vmem:[%s5 + $0x90] sm:$0xff]
        %v1691 = vld [vmem:[%s5 + $0x98] sm:$0xff]
        %v1692 = vld [vmem:[%s5 + $0xa0] sm:$0xff]
        %v1693 = vld [vmem:[%s5 + $0xa8] sm:$0xff]
        %v1694 = vld [vmem:[%s5 + $0xb0] sm:$0xff]
        %v1695 = vld [vmem:[%s5 + $0xb8] sm:$0xff]
        %v1696 = vld [vmem:[%s5 + $0xc0] sm:$0xff]
        %v1697 = vld [vmem:[%s5 + $0xc8] sm:$0xff]
        %v1698 = vld [vmem:[%s5 + $0xd0] sm:$0xff]
        %v1699 = vld [vmem:[%s5 + $0xd8] sm:$0xff]
        %v1700 = vld [vmem:[%s5 + $0xe0] sm:$0xff]
        %v1701 = vld [vmem:[%s5 + $0xe8] sm:$0xff]
        %v1702 = vld [vmem:[%s5 + $0xf0] sm:$0xff]
        %v1703 = vld [vmem:[%s5 + $0xf8] sm:$0xff]
        %v1704 = vld [vmem:[%s6] sm:$0x3]
        %v1706 = vlaneseq
        %v1707 = vshrl.u32 %v1706, 7
        %v1708 = vsub.s32 0, %v1707
        %v1709 = vrot.slane %v1704, %v1708
        %v1710 = vlaneseq
        %v1711 = vshrl.u32 %v1710, 7
        %v1712 = vsub.s32 1, %v1711
        %v1713 = vrot.slane %v1704, %v1712
        %v1748 = vunpack.c.l.b16 %v1672
        %v1749 = vunpack.c.h.b16 %v1672
        %v1750 = vunpack.c.l.b16 %v1673
        %v1751 = vunpack.c.h.b16 %v1673
        %v1752 = vunpack.c.l.b16 %v1674
        %v1753 = vunpack.c.h.b16 %v1674
        %v1754 = vunpack.c.l.b16 %v1675
        %v1755 = vunpack.c.h.b16 %v1675
        %v1756 = vunpack.c.l.b16 %v1676
        %v1757 = vunpack.c.h.b16 %v1676
        %v1758 = vunpack.c.l.b16 %v1677
        %v1759 = vunpack.c.h.b16 %v1677
        %v1760 = vunpack.c.l.b16 %v1678
        %v1761 = vunpack.c.h.b16 %v1678
        %v1762 = vunpack.c.l.b16 %v1679
        %v1763 = vunpack.c.h.b16 %v1679
        %v1764 = vunpack.c.l.b16 %v1680
        %v1765 = vunpack.c.h.b16 %v1680
        %v1766 = vunpack.c.l.b16 %v1681
        %v1767 = vunpack.c.h.b16 %v1681
        %v1768 = vunpack.c.l.b16 %v1682
        %v1769 = vunpack.c.h.b16 %v1682
        %v1770 = vunpack.c.l.b16 %v1683
        %v1771 = vunpack.c.h.b16 %v1683
        %v1772 = vunpack.c.l.b16 %v1684
        %v1773 = vunpack.c.h.b16 %v1684
        %v1774 = vunpack.c.l.b16 %v1685
        %v1775 = vunpack.c.h.b16 %v1685
        %v1776 = vunpack.c.l.b16 %v1686
        %v1777 = vunpack.c.h.b16 %v1686
        %v1778 = vunpack.c.l.b16 %v1687
        %v1779 = vunpack.c.h.b16 %v1687
        %v1780 = vunpack.c.l.b16 %v1688
        %v1781 = vunpack.c.h.b16 %v1688
        %v1782 = vunpack.c.l.b16 %v1689
        %v1783 = vunpack.c.h.b16 %v1689
        %v1784 = vunpack.c.l.b16 %v1690
        %v1785 = vunpack.c.h.b16 %v1690
        %v1786 = vunpack.c.l.b16 %v1691
        %v1787 = vunpack.c.h.b16 %v1691
        %v1788 = vunpack.c.l.b16 %v1692
        %v1789 = vunpack.c.h.b16 %v1692
        %v1790 = vunpack.c.l.b16 %v1693
        %v1791 = vunpack.c.h.b16 %v1693
        %v1792 = vunpack.c.l.b16 %v1694
        %v1793 = vunpack.c.h.b16 %v1694
        %v1794 = vunpack.c.l.b16 %v1695
        %v1795 = vunpack.c.h.b16 %v1695
        %v1796 = vunpack.c.l.b16 %v1696
        %v1797 = vunpack.c.h.b16 %v1696
        %v1798 = vunpack.c.l.b16 %v1697
        %v1799 = vunpack.c.h.b16 %v1697
        %v1800 = vunpack.c.l.b16 %v1698
        %v1801 = vunpack.c.h.b16 %v1698
        %v1802 = vunpack.c.l.b16 %v1699
        %v1803 = vunpack.c.h.b16 %v1699
        %v1804 = vunpack.c.l.b16 %v1700
        %v1805 = vunpack.c.h.b16 %v1700
        %v1806 = vunpack.c.l.b16 %v1701
        %v1807 = vunpack.c.h.b16 %v1701
        %v1808 = vunpack.c.l.b16 %v1702
        %v1809 = vunpack.c.h.b16 %v1702
        %v1810 = vunpack.c.l.b16 %v1703
        %v1811 = vunpack.c.h.b16 %v1703
        %v1812 = vpack.c.b16 %v1750, %v1748
        %v1813 = vpack.c.b16 %v1751, %v1749
        %v1814 = vpack.c.b16 %v1754, %v1752
        %v1815 = vpack.c.b16 %v1755, %v1753
        %v1816 = vpack.c.b16 %v1758, %v1756
        %v1817 = vpack.c.b16 %v1759, %v1757
        %v1818 = vpack.c.b16 %v1762, %v1760
        %v1819 = vpack.c.b16 %v1763, %v1761
        %v1820 = vpack.c.b16 %v1766, %v1764
        %v1821 = vpack.c.b16 %v1767, %v1765
        %v1822 = vpack.c.b16 %v1770, %v1768
        %v1823 = vpack.c.b16 %v1771, %v1769
        %v1824 = vpack.c.b16 %v1774, %v1772
        %v1825 = vpack.c.b16 %v1775, %v1773
        %v1826 = vpack.c.b16 %v1778, %v1776
        %v1827 = vpack.c.b16 %v1779, %v1777
        %v1828 = vpack.c.b16 %v1782, %v1780
        %v1829 = vpack.c.b16 %v1783, %v1781
        %v1830 = vpack.c.b16 %v1786, %v1784
        %v1831 = vpack.c.b16 %v1787, %v1785
        %v1832 = vpack.c.b16 %v1790, %v1788
        %v1833 = vpack.c.b16 %v1791, %v1789
        %v1834 = vpack.c.b16 %v1794, %v1792
        %v1835 = vpack.c.b16 %v1795, %v1793
        %v1836 = vpack.c.b16 %v1798, %v1796
        %v1837 = vpack.c.b16 %v1799, %v1797
        %v1838 = vpack.c.b16 %v1802, %v1800
        %v1839 = vpack.c.b16 %v1803, %v1801
        %v1840 = vpack.c.b16 %v1806, %v1804
        %v1841 = vpack.c.b16 %v1807, %v1805
        %v1842 = vpack.c.b16 %v1810, %v1808
        %v1843 = vpack.c.b16 %v1811, %v1809
        %1876 = vmatprep.subr.bf16.mxu0 %v1813
        %1877 = vmatpush1.bf16.msra.mxu0 %v1812
        %1878 = vmatprep.subr.bf16.mxu0 %v1815
        %1879 = vmatpush1.bf16.msra.mxu0 %v1814
        %1880 = vmatprep.subr.bf16.mxu0 %v1817
        %1881 = vmatpush1.bf16.msra.mxu0 %v1816
        %1882 = vmatprep.subr.bf16.mxu0 %v1819
        %1883 = vmatpush1.bf16.msra.mxu0 %v1818
        %1884 = vmatprep.subr.bf16.mxu0 %v1821
        %1885 = vmatpush1.bf16.msra.mxu0 %v1820
        %1886 = vmatprep.subr.bf16.mxu0 %v1823
        %1887 = vmatpush1.bf16.msra.mxu0 %v1822
        %1888 = vmatprep.subr.bf16.mxu0 %v1825
        %1889 = vmatpush1.bf16.msra.mxu0 %v1824
        %1890 = vmatprep.subr.bf16.mxu0 %v1827
        %1891 = vmatpush1.bf16.msra.mxu0 %v1826
        %1892 = vmatprep.subr.bf16.mxu0 %v1829
        %1893 = vmatpush1.bf16.msra.mxu0 %v1828
        %1894 = vmatprep.subr.bf16.mxu0 %v1831
        %1895 = vmatpush1.bf16.msra.mxu0 %v1830
        %1896 = vmatprep.subr.bf16.mxu0 %v1833
        %1897 = vmatpush1.bf16.msra.mxu0 %v1832
        %1898 = vmatprep.subr.bf16.mxu0 %v1835
        %1899 = vmatpush1.bf16.msra.mxu0 %v1834
        %1900 = vmatprep.subr.bf16.mxu0 %v1837
        %1901 = vmatpush1.bf16.msra.mxu0 %v1836
        %1902 = vmatprep.subr.bf16.mxu0 %v1839
        %1903 = vmatpush1.bf16.msra.mxu0 %v1838
        %1904 = vmatprep.subr.bf16.mxu0 %v1841
        %1905 = vmatpush1.bf16.msra.mxu0 %v1840
        %1906 = vmatprep.subr.bf16.mxu0 %v1843
        %1907 = vmatpush1.bf16.msra.mxu0 %v1842
        %1908 = vmatprep.mubr.bf16.mxu0 %v1657
        %1909 = vmatmul.mubr.bf16.gmra.mrb[0].mxu0 %v1656
        %v1910 = vpop.f32.mrb[0].mxu0
        %v1911 = vadd.f32 %v1709, %v1910
        %v1912 = vpop.f32.mrb[0].mxu0
        %v1913 = vadd.f32 %v1713, %v1912
        %v1914 = vpop.f32.mrb[0].mxu0
        %v1915 = vadd.f32 %v1709, %v1914
        %v1916 = vpop.f32.mrb[0].mxu0
        %v1917 = vadd.f32 %v1713, %v1916
        %1918 = vmatprep.mubr.bf16.mxu0 %v1659
        %1919 = vmatmul.mubr.bf16.gmra.mrb[0].mxu0 %v1658
        %v1920 = vpop.f32.mrb[0].mxu0
        %v1921 = vadd.f32 %v1709, %v1920
        %v1922 = vpop.f32.mrb[0].mxu0
        %v1923 = vadd.f32 %v1713, %v1922
        %v1924 = vpop.f32.mrb[0].mxu0
        %v1925 = vadd.f32 %v1709, %v1924
        %v1926 = vpop.f32.mrb[0].mxu0
        %v1927 = vadd.f32 %v1713, %v1926
        %1928 = vmatprep.mubr.bf16.mxu0 %v1661
        %1929 = vmatmul.mubr.bf16.gmra.mrb[0].mxu0 %v1660
        %v1930 = vpop.f32.mrb[0].mxu0
        %v1931 = vadd.f32 %v1709, %v1930
        %v1932 = vpop.f32.mrb[0].mxu0
        %v1933 = vadd.f32 %v1713, %v1932
        %v1934 = vpop.f32.mrb[0].mxu0
        %v1935 = vadd.f32 %v1709, %v1934
        %v1936 = vpop.f32.mrb[0].mxu0
        %v1937 = vadd.f32 %v1713, %v1936
        %1938 = vmatprep.mubr.bf16.mxu0 %v1663
        %1939 = vmatmul.mubr.bf16.gmra.mrb[0].mxu0 %v1662
        %v1940 = vpop.f32.mrb[0].mxu0
        %v1941 = vadd.f32 %v1709, %v1940
        %v1942 = vpop.f32.mrb[0].mxu0
        %v1943 = vadd.f32 %v1713, %v1942
        %v1944 = vpop.f32.mrb[0].mxu0
        %v1945 = vadd.f32 %v1709, %v1944
        %v1946 = vpop.f32.mrb[0].mxu0
        %v1947 = vadd.f32 %v1713, %v1946
        %1948 = vmatprep.mubr.bf16.mxu0 %v1665
        %1949 = vmatmul.mubr.bf16.gmra.mrb[0].mxu0 %v1664
        %v1950 = vpop.f32.mrb[0].mxu0
        %v1951 = vadd.f32 %v1709, %v1950
        %v1952 = vpop.f32.mrb[0].mxu0
        %v1953 = vadd.f32 %v1713, %v1952
        %v1954 = vpop.f32.mrb[0].mxu0
        %v1955 = vadd.f32 %v1709, %v1954
        %v1956 = vpop.f32.mrb[0].mxu0
        %v1957 = vadd.f32 %v1713, %v1956
        %1958 = vmatprep.mubr.bf16.mxu0 %v1667
        %1959 = vmatmul.mubr.bf16.gmra.mrb[0].mxu0 %v1666
        %v1960 = vpop.f32.mrb[0].mxu0
        %v1961 = vadd.f32 %v1709, %v1960
        %v1962 = vpop.f32.mrb[0].mxu0
        %v1963 = vadd.f32 %v1713, %v1962
        %v1964 = vpop.f32.mrb[0].mxu0
        %v1965 = vadd.f32 %v1709, %v1964
        %v1966 = vpop.f32.mrb[0].mxu0
        %v1967 = vadd.f32 %v1713, %v1966
        %1968 = vmatprep.mubr.bf16.mxu0 %v1669
        %1969 = vmatmul.mubr.bf16.gmra.mrb[0].mxu0 %v1668
        %v1970 = vpop.f32.mrb[0].mxu0
        %v1971 = vadd.f32 %v1709, %v1970
        %v1972 = vpop.f32.mrb[0].mxu0
        %v1973 = vadd.f32 %v1713, %v1972
        %v1974 = vpop.f32.mrb[0].mxu0
        %v1975 = vadd.f32 %v1709, %v1974
        %v1976 = vpop.f32.mrb[0].mxu0
        %v1977 = vadd.f32 %v1713, %v1976
        %1978 = vmatprep.mubr.bf16.mxu0 %v1671
        %1979 = vmatmul.mubr.bf16.gmra.mrb[0].mxu0 %v1670
        %v1980 = vpop.f32.mrb[0].mxu0
        %v1981 = vadd.f32 %v1709, %v1980
        %v1982 = vpop.f32.mrb[0].mxu0
        %v1983 = vadd.f32 %v1713, %v1982
        %v1984 = vpop.f32.mrb[0].mxu0
        %v1985 = vadd.f32 %v1709, %v1984
        %v1986 = vpop.f32.mrb[0].mxu0
        %v1987 = vadd.f32 %v1713, %v1986
        %1988 = vdwg.mxu0
        %v1989 = vtanh.pop %v1911
        %v1990 = vtanh.pop %v1913
        %v1991 = vtanh.pop %v1915
        %v1992 = vtanh.pop %v1917
        %v1993 = vtanh.pop %v1921
        %v1994 = vtanh.pop %v1923
        %v1995 = vtanh.pop %v1925
        %v1996 = vtanh.pop %v1927
        %v1997 = vtanh.pop %v1931
        %v1998 = vtanh.pop %v1933
        %v1999 = vtanh.pop %v1935
        %v2000 = vtanh.pop %v1937
        %v2001 = vtanh.pop %v1941
        %v2002 = vtanh.pop %v1943
        %v2003 = vtanh.pop %v1945
        %v2004 = vtanh.pop %v1947
        %v2005 = vtanh.pop %v1951
        %v2006 = vtanh.pop %v1953
        %v2007 = vtanh.pop %v1955
        %v2008 = vtanh.pop %v1957
        %v2009 = vtanh.pop %v1961
        %v2010 = vtanh.pop %v1963
        %v2011 = vtanh.pop %v1965
        %v2012 = vtanh.pop %v1967
        %v2013 = vtanh.pop %v1971
        %v2014 = vtanh.pop %v1973
        %v2015 = vtanh.pop %v1975
        %v2016 = vtanh.pop %v1977
        %v2017 = vtanh.pop %v1981
        %v2018 = vtanh.pop %v1983
        %v2019 = vtanh.pop %v1985
        %v2020 = vtanh.pop %v1987
        %v2021 = vpack.c.bf16 %v1991, %v1989
        %v2022 = vpack.c.bf16 %v1992, %v1990
        %v2023 = vpack.c.bf16 %v1995, %v1993
        %v2024 = vpack.c.bf16 %v1996, %v1994
        %v2025 = vpack.c.bf16 %v1999, %v1997
        %v2026 = vpack.c.bf16 %v2000, %v1998
        %v2027 = vpack.c.bf16 %v2003, %v2001
        %v2028 = vpack.c.bf16 %v2004, %v2002
        %v2029 = vpack.c.bf16 %v2007, %v2005
        %v2030 = vpack.c.bf16 %v2008, %v2006
        %v2031 = vpack.c.bf16 %v2011, %v2009
        %v2032 = vpack.c.bf16 %v2012, %v2010
        %v2033 = vpack.c.bf16 %v2015, %v2013
        %v2034 = vpack.c.bf16 %v2016, %v2014
        %v2035 = vpack.c.bf16 %v2019, %v2017
        %v2036 = vpack.c.bf16 %v2020, %v2018
        %v2053 = vunpack.c.l.b16 %v2021
        %v2054 = vunpack.c.l.b16 %v2022
        %v2055 = vunpack.c.h.b16 %v2021
        %v2056 = vunpack.c.h.b16 %v2022
        %v2057 = vunpack.c.l.b16 %v2023
        %v2058 = vunpack.c.l.b16 %v2024
        %v2059 = vunpack.c.h.b16 %v2023
        %v2060 = vunpack.c.h.b16 %v2024
        %v2061 = vunpack.c.l.b16 %v2025
        %v2062 = vunpack.c.l.b16 %v2026
        %v2063 = vunpack.c.h.b16 %v2025
        %v2064 = vunpack.c.h.b16 %v2026
        %v2065 = vunpack.c.l.b16 %v2027
        %v2066 = vunpack.c.l.b16 %v2028
        %v2067 = vunpack.c.h.b16 %v2027
        %v2068 = vunpack.c.h.b16 %v2028
        %v2069 = vunpack.c.l.b16 %v2029
        %v2070 = vunpack.c.l.b16 %v2030
        %v2071 = vunpack.c.h.b16 %v2029
        %v2072 = vunpack.c.h.b16 %v2030
        %v2073 = vunpack.c.l.b16 %v2031
        %v2074 = vunpack.c.l.b16 %v2032
        %v2075 = vunpack.c.h.b16 %v2031
        %v2076 = vunpack.c.h.b16 %v2032
        %v2077 = vunpack.c.l.b16 %v2033
        %v2078 = vunpack.c.l.b16 %v2034
        %v2079 = vunpack.c.h.b16 %v2033
        %v2080 = vunpack.c.h.b16 %v2034
        %v2081 = vunpack.c.l.b16 %v2035
        %v2082 = vunpack.c.l.b16 %v2036
        %v2083 = vunpack.c.h.b16 %v2035
        %v2084 = vunpack.c.h.b16 %v2036
        %v2085 = vpack.c.b16 %v2054, %v2053
        %v2086 = vpack.c.b16 %v2056, %v2055
        %v2087 = vpack.c.b16 %v2058, %v2057
        %v2088 = vpack.c.b16 %v2060, %v2059
        %v2089 = vpack.c.b16 %v2062, %v2061
        %v2090 = vpack.c.b16 %v2064, %v2063
        %v2091 = vpack.c.b16 %v2066, %v2065
        %v2092 = vpack.c.b16 %v2068, %v2067
        %v2093 = vpack.c.b16 %v2070, %v2069
        %v2094 = vpack.c.b16 %v2072, %v2071
        %v2095 = vpack.c.b16 %v2074, %v2073
        %v2096 = vpack.c.b16 %v2076, %v2075
        %v2097 = vpack.c.b16 %v2078, %v2077
        %v2098 = vpack.c.b16 %v2080, %v2079
        %v2099 = vpack.c.b16 %v2082, %v2081
        %v2100 = vpack.c.b16 %v2084, %v2083
        %2117 = vst [vmem:[%s299] sm:$0xff] %v2085
        %2118 = vst [vmem:[%s299 + $0x8] sm:$0xff] %v2086
        %2119 = vst [vmem:[%s299 + $0x10] sm:$0xff] %v2087
        %2120 = vst [vmem:[%s299 + $0x18] sm:$0xff] %v2088
        %2121 = vst [vmem:[%s299 + $0x20] sm:$0xff] %v2089
        %2122 = vst [vmem:[%s299 + $0x28] sm:$0xff] %v2090
        %2123 = vst [vmem:[%s299 + $0x30] sm:$0xff] %v2091
        %2124 = vst [vmem:[%s299 + $0x38] sm:$0xff] %v2092
        %2125 = vst [vmem:[%s299 + $0x40] sm:$0xff] %v2093
        %2126 = vst [vmem:[%s299 + $0x48] sm:$0xff] %v2094
        %2127 = vst [vmem:[%s299 + $0x50] sm:$0xff] %v2095
        %2128 = vst [vmem:[%s299 + $0x58] sm:$0xff] %v2096
        %2129 = vst [vmem:[%s299 + $0x60] sm:$0xff] %v2097
        %2130 = vst [vmem:[%s299 + $0x68] sm:$0xff] %v2098
        %2131 = vst [vmem:[%s299 + $0x70] sm:$0xff] %v2099
        %2132 = vst [vmem:[%s299 + $0x78] sm:$0xff] %v2100
        %s2133 = sand.u32 %s182, 1
        %s2134 = scalar_lea.sflag [#allocation4], %s2133
        %s2135 = sand.u32 %s182, 1
        %s2136 = smul.addr %s2135, 128
        %s2137 = scalar_lea.vmem [#allocation5], %s2136
        // Predicated region
        $region53: #{tpu_custom_call.1} parent=47 // pred_check
          %p2138 = pneg %p192
        $region54: #{tpu_custom_call.1} parent=47 // pred_check_branch
          %2140 = sbr.rel (%p2138) target = $region56
        $region55: #{tpu_custom_call.1} parent=47 // pred_region
          %s2141 = smul.u32 16, %s22
          %s2142 = ssub.s32 38, %s2141
          %p2143 = scmp.lt.s32.totalorder %s2142, 16
          %s2144 = scalar_select %p2143, %s2142, 16
          %s2145 = smul.u32 64, %s2144
          %s2146 = smul.u32 %s2145, 2
          %s2148 = ssub.s32 2048, %s2146
          %2149 = vsyncadd %s2134, %s2148
          %p2150 = scmp.ne.s32.totalorder 0, %s2146
          %s2151 = smul.addr %s2141, 2
          %s2152 = smul.addr %s2151, 64
          %s2153 = scalar_lea.hbm %s7, %s2152
          %s2154 = smul.u32 8, %s2144
          %s2155 = sshll.u32 %s2137, 4
          %s2156 = int_to_ptr.vmem [resolvable:$true] %s2155
          %s2157 = sshll.u32 %s2154, 4
          %2161 = dma.vmem_to_hbm [thread:$0]  (%p2150), %s2156, %s2157, %s2153, %s2134, 128, 128, 8
        $region56: #{tpu_custom_call.1} parent=47 // pred_fallthru
          _
      $region48: #{tpu_custom_call.1} parent=5 // pred_fallthru
        _
      %p2162 = scmp.le.s32.totalorder 2, %s17
      // Predicated region
      $region57: #{tpu_custom_call.1} parent=5 // pred_check
        %p2163 = pneg %p2162
      $region58: #{tpu_custom_call.1} parent=5 // pred_check_branch
        %2165 = sbr.rel (%p2163) target = $region60
      $region59: #{tpu_custom_call.1} parent=5 // pred_region
        %s2166 = ssub.s32 %s17, 2
        // Predicated region
        $region61: #{tpu_custom_call.1} parent=59 // pred_check
          %p2167 = pneg %p198
        $region62: #{tpu_custom_call.1} parent=59 // pred_check_branch
          %2169 = sbr.rel (%p2167) target = $region64
        $region63: #{tpu_custom_call.1} parent=59 // pred_region
          %s2170 = sand.u32 %s183, 1
          %s2171 = scalar_lea.sflag [#allocation4], %s2170
          %s2172 = sand.u32 %s183, 1
          %s2173 = smul.addr %s2172, 128
          %s2174 = scalar_lea.vmem [#allocation5], %s2173
          %2175 = dma.done %s2171, 2048
        $region64: #{tpu_custom_call.1} parent=59 // pred_fallthru
          _
      $region60: #{tpu_custom_call.1} parent=5 // pred_fallthru
        _
    $region6: #{tpu_custom_call.1} parent=1 // loop_footer
      %s21 = sadd.s32 1, %s17
    $region7: #{tpu_custom_call.1} parent=1 // loop_footer_branch
      %16 = sbr.rel target = $region3
    $region8: #{tpu_custom_call.1} parent=1 // loop_exit
      _
    %2176 = vsyncpa [#allocation3], 1
    %s2177 = scalar_lea.sflag [#allocation3], 1
    %2178 = vsyncpa %s2177, 1
    %2179 = vsyncpa [#allocation4], 1
    %s2180 = scalar_lea.sflag [#allocation4], 1
    %2181 = vsyncpa %s2180, 1

</llo_original>
